<compile_context>
chip_gen: v5e
topology: v5e:2x2
jax: 0.10.0
libtpu: 0.0.40
codegen_flags: <defaults>
</compile_context>

<pallas_src>
import numpy as np

import jax
import jax.numpy as jnp
from jax.experimental import pallas as pl
from jax.experimental.pallas import tpu as pltpu


# ----------------------- host-side weight preparation ---------------------- #
def _banded_weights(w_hwio, width):
    """Per-dy banded (block-Toeplitz) matrices for a 3x3 SAME conv acting on
    rows flattened as (w, cin) -> lanes.

    Returns T of shape (3, width*cin, width*cout) such that
        out_row[h] = sum_dy pad_row[h + dy] @ T[dy]
    where pad_row has one zero row above/below the image (vertical SAME pad);
    the horizontal SAME pad and the 3 dx taps are folded into T.  Output
    columns are permuted [even w | odd w] so the following 2x2 max-pool's
    horizontal reduction is a max of two aligned lane halves.
    """
    kh, kw, cin, cout = w_hwio.shape
    sel = np.zeros((kw, width, width), dtype=np.float32)     # static 0/1 band
    for g in range(width):                                    # g = layout col
        w = 2 * g if g < width // 2 else 2 * (g - width // 2) + 1
        for dx in range(kw):
            u = w + dx - 1                                    # input column
            if 0 <= u < width:
                sel[dx, u, g] = 1.0
    t = jnp.einsum("xug,yxio->yuigo", jnp.asarray(sel), w_hwio)
    return t.reshape(kh, width * cin, width * cout)


# ----------------------- fused backbone kernel ----------------------------- #
def _stage1_fused_kernel(x_ref, t1_ref, b1_ref, t2_ref, b2_ref, o_ref,
                         pad1_ref, pad2_ref):
    # x_ref : (1, H, W*C0)          one image, rows flattened (w, c) -> lanes
    # t1_ref: (3, W*C0, W*C1)       bf16 banded conv1 weights (per dy)
    # b1_ref: (1, W*C1)             f32 bias tiled over w
    # t2_ref: (3, W1*C1, W1*C2)     bf16 banded conv2 weights (per dy)
    # b2_ref: (1, W1*C2)            f32 bias tiled over w
    # o_ref : (1, H//4, (W//4)*C2)  lane-dense output block
    # pad1_ref / pad2_ref : (H+2, W*C) vertical-SAME-padded rows (VMEM scratch)
    H, WC0 = x_ref.shape[1], x_ref.shape[2]
    WC1 = t1_ref.shape[2]
    H1, W1C1 = H // 2, WC1 // 2
    W1C2 = t2_ref.shape[2]
    H2, W2C2 = H1 // 2, W1C2 // 2
    f32, bf16 = jnp.float32, jnp.bfloat16

    # ---- conv1 (+bias, ReLU): 3 banded MXU matmuls over padded row slices ----
    pad1_ref[0:1, :] = jnp.zeros((1, WC0), f32)              # top border row
    pad1_ref[H + 1:H + 2, :] = jnp.zeros((1, WC0), f32)      # bottom border row
    pad1_ref[1:H + 1, :] = x_ref[0]                          # interior, lane 0

    acc1 = jnp.dot(pad1_ref[0:H, :].astype(bf16), t1_ref[0],
                   preferred_element_type=f32)
    acc1 += jnp.dot(pad1_ref[1:H + 1, :].astype(bf16), t1_ref[1],
                    preferred_element_type=f32)
    acc1 += jnp.dot(pad1_ref[2:H + 2, :].astype(bf16), t1_ref[2],
                    preferred_element_type=f32)
    h1 = jnp.maximum(acc1 + b1_ref[...], 0.0)                # (H, W*C1)

    # ---- pool1 2x2: rows via pair reshape, cols via even|odd lane halves ----
    v1 = h1.reshape(H1, 2, WC1)
    v1 = jnp.maximum(v1[:, :1, :], v1[:, 1:, :]).reshape(H1, WC1)
    p1 = jnp.maximum(v1[:, :W1C1], v1[:, W1C1:])             # (H1, W1*C1)

    # ---- conv2 (+bias, ReLU) ----
    pad2_ref[0:1, :] = jnp.zeros((1, W1C1), f32)
    pad2_ref[H1 + 1:H1 + 2, :] = jnp.zeros((1, W1C1), f32)
    pad2_ref[1:H1 + 1, :] = p1

    acc2 = jnp.dot(pad2_ref[0:H1, :].astype(bf16), t2_ref[0],
                   preferred_element_type=f32)
    acc2 += jnp.dot(pad2_ref[1:H1 + 1, :].astype(bf16), t2_ref[1],
                    preferred_element_type=f32)
    acc2 += jnp.dot(pad2_ref[2:H1 + 2, :].astype(bf16), t2_ref[2],
                    preferred_element_type=f32)
    h2 = jnp.maximum(acc2 + b2_ref[...], 0.0)                # (H1, W1*C2)

    # ---- pool2 2x2 + single unmasked (8,128) output store ----
    v2 = h2.reshape(H2, 2, W1C2)
    v2 = jnp.maximum(v2[:, :1, :], v2[:, 1:, :]).reshape(H2, W1C2)
    p2 = jnp.maximum(v2[:, :W2C2], v2[:, W2C2:])             # (H2, W2*C2)
    o_ref[0] = p2.astype(o_ref.dtype)


# ---------------------------- Stage1 forward -------------------------------- #
def init_backbone_params(key):
    # Small VGG-style backbone: (conv3x3 3->8, ReLU, maxpool) x
    #                           (conv3x3 8->16, ReLU, maxpool)
    k1, k2, k3, k4 = jax.random.split(key, 4)
    w1 = jax.random.normal(k1, (3, 3, 3, 8), jnp.float32) * 0.1
    b1 = jax.random.normal(k2, (1, 8), jnp.float32) * 0.1
    w2 = jax.random.normal(k3, (3, 3, 8, 16), jnp.float32) * 0.1
    b2 = jax.random.normal(k4, (1, 16), jnp.float32) * 0.1
    return (w1, b1, w2, b2)


def stage1_forward(x_nchw, gts, params):
    """Returns the backbone feature map in NCHW, matching Stage1.forward."""
    del gts  # _prepare_anchor_boxes only mutates internal training state; the
             # returned tensor is the backbone feature map, untouched by it.
    # TODO(synk): anchor-box generation / IoU matching side effects
    # (_generate_anchor_boxes, _prepare_anchor_boxes) and the unused
    # INVERSE_TRANSFORM are not reproduced since they do not contribute to the
    # returned tensor.
    w1, b1, w2, b2 = params
    N, C0, H, W = x_nchw.shape
    C1, C2 = w1.shape[-1], w2.shape[-1]
    H1, W1 = H // 2, W // 2
    H2, W2 = H1 // 2, W1 // 2

    # Layout glue: NCHW -> NHWC -> lane-dense (N, H, W*C0).
    x = jnp.transpose(x_nchw, (0, 2, 3, 1)).reshape(N, H, W * C0)

    # Host-side weight prep (pure weight re-layout, done once per call).
    t1 = _banded_weights(w1, W).astype(jnp.bfloat16)          # (3, W*C0, W*C1)
    t2 = _banded_weights(w2, W1).astype(jnp.bfloat16)         # (3, W1*C1, W1*C2)
    b1t = jnp.tile(b1.reshape(1, C1), (1, W))                 # (1, W*C1)
    b2t = jnp.tile(b2.reshape(1, C2), (1, W1))                # (1, W1*C2)

    flops = 2 * N * 3 * (H * (W * C0) * (W * C1) + H1 * (W1 * C1) * (W1 * C2))
    bytes_accessed = (x.size * x.dtype.itemsize + t1.size * 2 + t2.size * 2
                      + N * H2 * W2 * C2 * 4)

    out = pl.pallas_call(
        _stage1_fused_kernel,
        out_shape=jax.ShapeDtypeStruct((N, H2, W2 * C2), x.dtype),
        grid=(N,),
        in_specs=[
            pl.BlockSpec((1, H, W * C0), lambda n: (n, 0, 0)),
            pl.BlockSpec((3, W * C0, W * C1), lambda n: (0, 0, 0)),
            pl.BlockSpec((1, W * C1), lambda n: (0, 0)),
            pl.BlockSpec((3, W1 * C1, W1 * C2), lambda n: (0, 0, 0)),
            pl.BlockSpec((1, W1 * C2), lambda n: (0, 0)),
        ],
        out_specs=pl.BlockSpec((1, H2, W2 * C2), lambda n: (n, 0, 0)),
        scratch_shapes=[
            pltpu.VMEM((H + 2, W * C0), jnp.float32),     # padded conv1 rows
            pltpu.VMEM((H1 + 2, W1 * C1), jnp.float32),   # padded conv2 rows
        ],
        compiler_params=pltpu.CompilerParams(
            dimension_semantics=("parallel",)),
        cost_estimate=pl.CostEstimate(
            flops=flops, transcendentals=0, bytes_accessed=bytes_accessed),
    )(x, t1, b1t, t2, b2t)

    out = out.reshape(N, H2, W2, C2)                     # NHWC feature map
    return jnp.transpose(out, (0, 3, 1, 2))              # NHWC -> NCHW


# ------------------------- pure-JAX reference ------------------------------- #
def _reference_forward(x_nchw, params):
    w1, b1, w2, b2 = params
    dn = ("NHWC", "HWIO", "NHWC")
    x = jnp.transpose(x_nchw, (0, 2, 3, 1))
    x = jax.lax.conv_general_dilated(x, w1, (1, 1), "SAME", dimension_numbers=dn)
    x = jnp.maximum(x + b1.reshape(1, 1, 1, -1), 0.0)
    x = jax.lax.reduce_window(x, -jnp.inf, jax.lax.max,
                              (1, 2, 2, 1), (1, 2, 2, 1), "VALID")
    x = jax.lax.conv_general_dilated(x, w2, (1, 1), "SAME", dimension_numbers=dn)
    x = jnp.maximum(x + b2.reshape(1, 1, 1, -1), 0.0)
    x = jax.lax.reduce_window(x, -jnp.inf, jax.lax.max,
                              (1, 2, 2, 1), (1, 2, 2, 1), "VALID")
    return jnp.transpose(x, (0, 3, 1, 2))


if __name__ == "__main__":
    key = jax.random.PRNGKey(0)
    kx, kg, kp = jax.random.split(key, 3)

    # Small image batch (NCHW, RGB) and ground-truth boxes (unused in output).
    x = jax.random.normal(kx, (2, 3, 32, 32), jnp.float32)
    gts = jax.random.uniform(kg, (2, 4, 5), jnp.float32)

    params = init_backbone_params(kp)

    out = stage1_forward(x, gts, params)
    out = jax.block_until_ready(out)
    assert out.shape == (2, 16, 8, 8), out.shape

    ref = jax.block_until_ready(_reference_forward(x, params))
    assert jnp.allclose(out, ref, rtol=2e-2, atol=2e-2), float(
        jnp.max(jnp.abs(out - ref)))

    print("KERNEL_OK")
</pallas_src>

<mosaic_0001>
module attributes {stable_mosaic.version = 11 : i64} {
  func.func @_stage1_fused_kernel(%arg0: i32, %arg1: memref<1x32x96xf32, #tpu.memory_space<vmem>>, %arg2: memref<3x96x256xbf16, #tpu.memory_space<vmem>>, %arg3: memref<1x256xf32, #tpu.memory_space<vmem>>, %arg4: memref<3x128x256xbf16, #tpu.memory_space<vmem>>, %arg5: memref<1x256xf32, #tpu.memory_space<vmem>>, %arg6: memref<1x8x128xf32, #tpu.memory_space<vmem>>, %arg7: memref<34x96xf32, #tpu.memory_space<vmem>>, %arg8: memref<18x128xf32, #tpu.memory_space<vmem>>) attributes {dimension_semantics = [#tpu.dimension_semantics<parallel>], iteration_bounds = array<i64: 2>, scalar_prefetch = 0 : i64, scratch_operands = 2 : i64, tpu.core_type = #tpu.core_type<tc>, window_params = [{transform_indices = @transform_0, window_bounds = array<i64: 1, 32, 96>}, {pipeline_mode = #tpu.pipeline_mode<synchronous>, transform_indices = @transform_1, window_bounds = array<i64: 3, 96, 256>}, {pipeline_mode = #tpu.pipeline_mode<synchronous>, transform_indices = @transform_2, window_bounds = array<i64: 1, 256>}, {pipeline_mode = #tpu.pipeline_mode<synchronous>, transform_indices = @transform_3, window_bounds = array<i64: 3, 128, 256>}, {pipeline_mode = #tpu.pipeline_mode<synchronous>, transform_indices = @transform_4, window_bounds = array<i64: 1, 256>}, {transform_indices = @transform_5, window_bounds = array<i64: 1, 8, 128>}]} {
    %cst = arith.constant 0.000000e+00 : f32
    %0 = vector.broadcast %cst : f32 to vector<1x96xf32>
    %c0 = arith.constant 0 : index
    %c0_0 = arith.constant 0 : index
    %1 = vector.load %arg7[%c0, %c0_0] : memref<34x96xf32, #tpu.memory_space<vmem>>, vector<1x96xf32>
    tpu.vector_store %arg7[%c0, %c0_0], %0 {strides = array<i32>} : memref<34x96xf32, #tpu.memory_space<vmem>>, vector<1x96xf32>,
    %cst_1 = arith.constant 0.000000e+00 : f32
    %2 = vector.broadcast %cst_1 : f32 to vector<1x96xf32>
    %c33 = arith.constant 33 : index
    %c0_2 = arith.constant 0 : index
    %3 = vector.load %arg7[%c33, %c0_2] : memref<34x96xf32, #tpu.memory_space<vmem>>, vector<1x96xf32>
    tpu.vector_store %arg7[%c33, %c0_2], %2 {strides = array<i32>} : memref<34x96xf32, #tpu.memory_space<vmem>>, vector<1x96xf32>,
    %c0_3 = arith.constant 0 : index
    %c0_4 = arith.constant 0 : index
    %c0_5 = arith.constant 0 : index
    %4 = vector.load %arg1[%c0_3, %c0_4, %c0_5] : memref<1x32x96xf32, #tpu.memory_space<vmem>>, vector<1x32x96xf32>
    %5 = vector.shape_cast %4 : vector<1x32x96xf32> to vector<32x96xf32>
    %c1 = arith.constant 1 : index
    %c0_6 = arith.constant 0 : index
    %6 = vector.load %arg7[%c1, %c0_6] : memref<34x96xf32, #tpu.memory_space<vmem>>, vector<32x96xf32>
    tpu.vector_store %arg7[%c1, %c0_6], %5 {strides = array<i32>} : memref<34x96xf32, #tpu.memory_space<vmem>>, vector<32x96xf32>,
    %c0_7 = arith.constant 0 : index
    %c0_8 = arith.constant 0 : index
    %7 = vector.load %arg7[%c0_7, %c0_8] : memref<34x96xf32, #tpu.memory_space<vmem>>, vector<32x96xf32>
    %8 = arith.truncf %7 : vector<32x96xf32> to vector<32x96xbf16>
    %c0_9 = arith.constant 0 : index
    %c0_10 = arith.constant 0 : index
    %c0_11 = arith.constant 0 : index
    %9 = vector.load %arg2[%c0_9, %c0_10, %c0_11] : memref<3x96x256xbf16, #tpu.memory_space<vmem>>, vector<1x96x256xbf16>
    %10 = vector.shape_cast %9 : vector<1x96x256xbf16> to vector<96x256xbf16>
    %cst_12 = arith.constant dense<0.000000e+00> : vector<32x256xf32>
    %11 = tpu.matmul %8, %10, %cst_12 {dimension_numbers = #tpu.dot_dimension_numbers<[1], [0], [0], [1], [0, 0, 1, 1], [], []>} : vector<32x96xbf16>, vector<96x256xbf16>, vector<32x256xf32> -> vector<32x256xf32>
    %c1_13 = arith.constant 1 : index
    %c0_14 = arith.constant 0 : index
    %12 = vector.load %arg7[%c1_13, %c0_14] : memref<34x96xf32, #tpu.memory_space<vmem>>, vector<32x96xf32>
    %13 = arith.truncf %12 : vector<32x96xf32> to vector<32x96xbf16>
    %c1_15 = arith.constant 1 : index
    %c0_16 = arith.constant 0 : index
    %c0_17 = arith.constant 0 : index
    %14 = vector.load %arg2[%c1_15, %c0_16, %c0_17] : memref<3x96x256xbf16, #tpu.memory_space<vmem>>, vector<1x96x256xbf16>
    %15 = vector.shape_cast %14 : vector<1x96x256xbf16> to vector<96x256xbf16>
    %cst_18 = arith.constant dense<0.000000e+00> : vector<32x256xf32>
    %16 = tpu.matmul %13, %15, %cst_18 {dimension_numbers = #tpu.dot_dimension_numbers<[1], [0], [0], [1], [0, 0, 1, 1], [], []>} : vector<32x96xbf16>, vector<96x256xbf16>, vector<32x256xf32> -> vector<32x256xf32>
    %17 = arith.addf %11, %16 : vector<32x256xf32>
    %c2 = arith.constant 2 : index
    %c0_19 = arith.constant 0 : index
    %18 = vector.load %arg7[%c2, %c0_19] : memref<34x96xf32, #tpu.memory_space<vmem>>, vector<32x96xf32>
    %19 = arith.truncf %18 : vector<32x96xf32> to vector<32x96xbf16>
    %c2_20 = arith.constant 2 : index
    %c0_21 = arith.constant 0 : index
    %c0_22 = arith.constant 0 : index
    %20 = vector.load %arg2[%c2_20, %c0_21, %c0_22] : memref<3x96x256xbf16, #tpu.memory_space<vmem>>, vector<1x96x256xbf16>
    %21 = vector.shape_cast %20 : vector<1x96x256xbf16> to vector<96x256xbf16>
    %cst_23 = arith.constant dense<0.000000e+00> : vector<32x256xf32>
    %22 = tpu.matmul %19, %21, %cst_23 {dimension_numbers = #tpu.dot_dimension_numbers<[1], [0], [0], [1], [0, 0, 1, 1], [], []>} : vector<32x96xbf16>, vector<96x256xbf16>, vector<32x256xf32> -> vector<32x256xf32>
    %23 = arith.addf %17, %22 : vector<32x256xf32>
    %c0_24 = arith.constant 0 : index
    %c0_25 = arith.constant 0 : index
    %24 = vector.load %arg3[%c0_24, %c0_25] : memref<1x256xf32, #tpu.memory_space<vmem>>, vector<1x256xf32>
    %25 = vector.broadcast %24 : vector<1x256xf32> to vector<32x256xf32>
    %26 = arith.addf %23, %25 : vector<32x256xf32>
    %cst_26 = arith.constant 0.000000e+00 : f32
    %27 = vector.broadcast %cst_26 : f32 to vector<32x256xf32>
    %28 = arith.maximumf %26, %27 : vector<32x256xf32>
    %29 = vector.shape_cast %28 : vector<32x256xf32> to vector<16x2x256xf32>
    %30 = vector.extract_strided_slice %29 {offsets = [0, 0, 0], sizes = [16, 1, 256], strides = [1, 1, 1]} : vector<16x2x256xf32> to vector<16x1x256xf32>
    %31 = vector.extract_strided_slice %29 {offsets = [0, 1, 0], sizes = [16, 1, 256], strides = [1, 1, 1]} : vector<16x2x256xf32> to vector<16x1x256xf32>
    %32 = arith.maximumf %30, %31 : vector<16x1x256xf32>
    %33 = vector.shape_cast %32 : vector<16x1x256xf32> to vector<16x256xf32>
    %34 = vector.extract_strided_slice %33 {offsets = [0, 0], sizes = [16, 128], strides = [1, 1]} : vector<16x256xf32> to vector<16x128xf32>
    %35 = vector.extract_strided_slice %33 {offsets = [0, 128], sizes = [16, 128], strides = [1, 1]} : vector<16x256xf32> to vector<16x128xf32>
    %36 = arith.maximumf %34, %35 : vector<16x128xf32>
    %cst_27 = arith.constant 0.000000e+00 : f32
    %37 = vector.broadcast %cst_27 : f32 to vector<1x128xf32>
    %c0_28 = arith.constant 0 : index
    %c0_29 = arith.constant 0 : index
    %38 = vector.load %arg8[%c0_28, %c0_29] : memref<18x128xf32, #tpu.memory_space<vmem>>, vector<1x128xf32>
    tpu.vector_store %arg8[%c0_28, %c0_29], %37 {strides = array<i32>} : memref<18x128xf32, #tpu.memory_space<vmem>>, vector<1x128xf32>,
    %cst_30 = arith.constant 0.000000e+00 : f32
    %39 = vector.broadcast %cst_30 : f32 to vector<1x128xf32>
    %c17 = arith.constant 17 : index
    %c0_31 = arith.constant 0 : index
    %40 = vector.load %arg8[%c17, %c0_31] : memref<18x128xf32, #tpu.memory_space<vmem>>, vector<1x128xf32>
    tpu.vector_store %arg8[%c17, %c0_31], %39 {strides = array<i32>} : memref<18x128xf32, #tpu.memory_space<vmem>>, vector<1x128xf32>,
    %c1_32 = arith.constant 1 : index
    %c0_33 = arith.constant 0 : index
    %41 = vector.load %arg8[%c1_32, %c0_33] : memref<18x128xf32, #tpu.memory_space<vmem>>, vector<16x128xf32>
    tpu.vector_store %arg8[%c1_32, %c0_33], %36 {strides = array<i32>} : memref<18x128xf32, #tpu.memory_space<vmem>>, vector<16x128xf32>,
    %c0_34 = arith.constant 0 : index
    %c0_35 = arith.constant 0 : index
    %42 = vector.load %arg8[%c0_34, %c0_35] : memref<18x128xf32, #tpu.memory_space<vmem>>, vector<16x128xf32>
    %43 = arith.truncf %42 : vector<16x128xf32> to vector<16x128xbf16>
    %c0_36 = arith.constant 0 : index
    %c0_37 = arith.constant 0 : index
    %c0_38 = arith.constant 0 : index
    %44 = vector.load %arg4[%c0_36, %c0_37, %c0_38] : memref<3x128x256xbf16, #tpu.memory_space<vmem>>, vector<1x128x256xbf16>
    %45 = vector.shape_cast %44 : vector<1x128x256xbf16> to vector<128x256xbf16>
    %cst_39 = arith.constant dense<0.000000e+00> : vector<16x256xf32>
    %46 = tpu.matmul %43, %45, %cst_39 {dimension_numbers = #tpu.dot_dimension_numbers<[1], [0], [0], [1], [0, 0, 1, 1], [], []>} : vector<16x128xbf16>, vector<128x256xbf16>, vector<16x256xf32> -> vector<16x256xf32>
    %c1_40 = arith.constant 1 : index
    %c0_41 = arith.constant 0 : index
    %47 = vector.load %arg8[%c1_40, %c0_41] : memref<18x128xf32, #tpu.memory_space<vmem>>, vector<16x128xf32>
    %48 = arith.truncf %47 : vector<16x128xf32> to vector<16x128xbf16>
    %c1_42 = arith.constant 1 : index
    %c0_43 = arith.constant 0 : index
    %c0_44 = arith.constant 0 : index
    %49 = vector.load %arg4[%c1_42, %c0_43, %c0_44] : memref<3x128x256xbf16, #tpu.memory_space<vmem>>, vector<1x128x256xbf16>
    %50 = vector.shape_cast %49 : vector<1x128x256xbf16> to vector<128x256xbf16>
    %cst_45 = arith.constant dense<0.000000e+00> : vector<16x256xf32>
    %51 = tpu.matmul %48, %50, %cst_45 {dimension_numbers = #tpu.dot_dimension_numbers<[1], [0], [0], [1], [0, 0, 1, 1], [], []>} : vector<16x128xbf16>, vector<128x256xbf16>, vector<16x256xf32> -> vector<16x256xf32>
    %52 = arith.addf %46, %51 : vector<16x256xf32>
    %c2_46 = arith.constant 2 : index
    %c0_47 = arith.constant 0 : index
    %53 = vector.load %arg8[%c2_46, %c0_47] : memref<18x128xf32, #tpu.memory_space<vmem>>, vector<16x128xf32>
    %54 = arith.truncf %53 : vector<16x128xf32> to vector<16x128xbf16>
    %c2_48 = arith.constant 2 : index
    %c0_49 = arith.constant 0 : index
    %c0_50 = arith.constant 0 : index
    %55 = vector.load %arg4[%c2_48, %c0_49, %c0_50] : memref<3x128x256xbf16, #tpu.memory_space<vmem>>, vector<1x128x256xbf16>
    %56 = vector.shape_cast %55 : vector<1x128x256xbf16> to vector<128x256xbf16>
    %cst_51 = arith.constant dense<0.000000e+00> : vector<16x256xf32>
    %57 = tpu.matmul %54, %56, %cst_51 {dimension_numbers = #tpu.dot_dimension_numbers<[1], [0], [0], [1], [0, 0, 1, 1], [], []>} : vector<16x128xbf16>, vector<128x256xbf16>, vector<16x256xf32> -> vector<16x256xf32>
    %58 = arith.addf %52, %57 : vector<16x256xf32>
    %c0_52 = arith.constant 0 : index
    %c0_53 = arith.constant 0 : index
    %59 = vector.load %arg5[%c0_52, %c0_53] : memref<1x256xf32, #tpu.memory_space<vmem>>, vector<1x256xf32>
    %60 = vector.broadcast %59 : vector<1x256xf32> to vector<16x256xf32>
    %61 = arith.addf %58, %60 : vector<16x256xf32>
    %cst_54 = arith.constant 0.000000e+00 : f32
    %62 = vector.broadcast %cst_54 : f32 to vector<16x256xf32>
    %63 = arith.maximumf %61, %62 : vector<16x256xf32>
    %64 = vector.shape_cast %63 : vector<16x256xf32> to vector<8x2x256xf32>
    %65 = vector.extract_strided_slice %64 {offsets = [0, 0, 0], sizes = [8, 1, 256], strides = [1, 1, 1]} : vector<8x2x256xf32> to vector<8x1x256xf32>
    %66 = vector.extract_strided_slice %64 {offsets = [0, 1, 0], sizes = [8, 1, 256], strides = [1, 1, 1]} : vector<8x2x256xf32> to vector<8x1x256xf32>
    %67 = arith.maximumf %65, %66 : vector<8x1x256xf32>
    %68 = vector.shape_cast %67 : vector<8x1x256xf32> to vector<8x256xf32>
    %69 = vector.extract_strided_slice %68 {offsets = [0, 0], sizes = [8, 128], strides = [1, 1]} : vector<8x256xf32> to vector<8x128xf32>
    %70 = vector.extract_strided_slice %68 {offsets = [0, 128], sizes = [8, 128], strides = [1, 1]} : vector<8x256xf32> to vector<8x128xf32>
    %71 = arith.maximumf %69, %70 : vector<8x128xf32>
    %c0_55 = arith.constant 0 : index
    %c0_56 = arith.constant 0 : index
    %c0_57 = arith.constant 0 : index
    %72 = vector.load %arg6[%c0_55, %c0_56, %c0_57] : memref<1x8x128xf32, #tpu.memory_space<vmem>>, vector<1x8x128xf32>
    %73 = vector.shape_cast %72 : vector<1x8x128xf32> to vector<8x128xf32>
    %74 = vector.shape_cast %71 : vector<8x128xf32> to vector<1x8x128xf32>
    tpu.vector_store %arg6[%c0_55, %c0_56, %c0_57], %74 {strides = array<i32>} : memref<1x8x128xf32, #tpu.memory_space<vmem>>, vector<1x8x128xf32>,
    return
  }
  func.func @transform_0(%arg0: i32) -> (i32, i32, i32) {
    %c0_i32 = arith.constant 0 : i32
    %c0_i32_0 = arith.constant 0 : i32
    %c0_i32_1 = arith.constant 0 : i32
    return %arg0, %c0_i32, %c0_i32_0 : i32, i32, i32
  }
  func.func @transform_1(%arg0: i32) -> (i32, i32, i32) {
    %c0_i32 = arith.constant 0 : i32
    %c0_i32_0 = arith.constant 0 : i32
    %c0_i32_1 = arith.constant 0 : i32
    %c0_i32_2 = arith.constant 0 : i32
    return %c0_i32, %c0_i32_0, %c0_i32_1 : i32, i32, i32
  }
  func.func @transform_2(%arg0: i32) -> (i32, i32) {
    %c0_i32 = arith.constant 0 : i32
    %c0_i32_0 = arith.constant 0 : i32
    %c0_i32_1 = arith.constant 0 : i32
    return %c0_i32, %c0_i32_0 : i32, i32
  }
  func.func @transform_3(%arg0: i32) -> (i32, i32, i32) {
    %c0_i32 = arith.constant 0 : i32
    %c0_i32_0 = arith.constant 0 : i32
    %c0_i32_1 = arith.constant 0 : i32
    %c0_i32_2 = arith.constant 0 : i32
    return %c0_i32, %c0_i32_0, %c0_i32_1 : i32, i32, i32
  }
  func.func @transform_4(%arg0: i32) -> (i32, i32) {
    %c0_i32 = arith.constant 0 : i32
    %c0_i32_0 = arith.constant 0 : i32
    %c0_i32_1 = arith.constant 0 : i32
    return %c0_i32, %c0_i32_0 : i32, i32
  }
  func.func @transform_5(%arg0: i32) -> (i32, i32, i32) {
    %c0_i32 = arith.constant 0 : i32
    %c0_i32_0 = arith.constant 0 : i32
    %c0_i32_1 = arith.constant 0 : i32
    return %arg0, %c0_i32, %c0_i32_0 : i32, i32, i32
  }
}

</mosaic_0001>

<llo_original>
// kernel: tpu_custom_call.1
$region0: #{tpu_custom_call.1}
  #allocation0 [shape = 'u32[]', space=smem, size = 0x4, offset = 0x4, fixed_abs, tag = 'smem constant byte address 0x4 - core index']
  #allocation1 [shape = 'u32[72,128]{1,0:T(1,128)}', space=vmem, size = 0x9000, scoped, tag = 'internal scratch']
  #allocation2 [shape = 'f32[34,96]{1,0:T(8,128)}', space=vmem, size = 0x5000, scoped, tag = 'scratch operand']
  #allocation3 [shape = 'f32[18,128]{1,0:T(8,128)}', space=vmem, size = 0x3000, scoped, tag = 'scratch operand']
  %s0 = inlined_call_operand.hbm [shape: f32[2,32,96], index: 0, kind: input, shape index: {}]
  %s1 = inlined_call_operand.hbm [shape: bf16[3,96,256], index: 1, kind: input, shape index: {}]
  %s2 = inlined_call_operand.hbm [shape: f32[1,256], index: 2, kind: input, shape index: {}]
  %s3 = inlined_call_operand.hbm [shape: bf16[3,128,256], index: 3, kind: input, shape index: {}]
  %s4 = inlined_call_operand.vmem [shape: f32[1,256], index: 4, kind: input, shape index: {}]
  %s5 = inlined_call_operand.hbm [shape: f32[2,8,128], index: 5, kind: output, shape index: {}]
  %s6 = sld [smem:[#allocation0]]
  $region69: #{tpu_custom_call.1} parent=0
    _
  %s8 = ssub.s32 1, %s6
  %s9 = scalar_select 0, %s8, %s6
  $region1: #{tpu_custom_call.1} parent=0
    #allocation4 [shape = 'u8[32768]{0}', space=vmem, size = 0x8000, scoped, tag = 'input window, operand 0']
    #allocation5 [shape = 's32[2]{0}', space=sflag, size = 0x8, scoped, tag = 'scoped memory for tpu_custom_call.1']
    #allocation6 [shape = 's32[2]{0}', space=sflag, size = 0x8, scoped, tag = 'scoped memory for tpu_custom_call.1']
    #allocation7 [shape = 'u8[147456]{0}', space=vmem, size = 0x24000, scoped, tag = 'input window, operand 1, single buffered']
    #allocation8 [shape = 's32[1]{0}', space=sflag, size = 0x4, scoped, tag = 'scoped memory for tpu_custom_call.1']
    #allocation9 [shape = 'u8[1024]{0}', space=vmem, size = 0x400, scoped, tag = 'input window, operand 2, single buffered']
    #allocation10 [shape = 'u8[196608]{0}', space=vmem, size = 0x30000, scoped, tag = 'input window, operand 3, single buffered']
    #allocation11 [shape = 's32[1]{0}', space=sflag, size = 0x4, scoped, tag = 'scoped memory for tpu_custom_call.1']
    #allocation12 [shape = 'u8[8192]{0}', space=vmem, size = 0x2000, scoped, tag = 'output window, operand 0']
    %10 = vsyncpa [#allocation5], 0
    %s11 = scalar_lea.sflag [#allocation5], 1
    %12 = vsyncpa %s11, 0
    %13 = vsyncpa [#allocation8], 0
    %14 = vsyncpa [#allocation11], 0
    %15 = vsyncpa [#allocation6], 0
    %s16 = scalar_lea.sflag [#allocation6], 1
    %17 = vsyncpa %s16, 0
    loop: start=0, step=1, limit=4
    $region2: #{tpu_custom_call.1} parent=1 // loop_pre_header
      _
    $region3: #{tpu_custom_call.1} parent=1 // loop_header
      %s19 = sphi 0, %s23
      %p20 = scmp.ge.s32.totalorder %s19, 4
      %s29 = sphi 0, %s31
      %s32 = sphi 0, %s29
      %s33 = sphi 0, %s32
      %s49 = sphi 0, %s33
      %s53 = sphi 0, %s53
      %s55 = sphi 0, %s53
      %s56 = sphi 0, %s55
      %s70 = sphi 0, %s56
      %s74 = sphi 0, %s74
      %s76 = sphi 0, %s74
      %s77 = sphi 0, %s76
      %s91 = sphi 0, %s77
      %s95 = sphi 0, %s95
      %s97 = sphi 0, %s95
      %s98 = sphi 0, %s97
      %s112 = sphi 0, %s98
      %s116 = sphi 0, %s116
      %s118 = sphi 0, %s116
      %s119 = sphi 0, %s118
      %s133 = sphi 0, %s119
      %s139 = sphi 0, %s141
      %s142 = sphi 0, %s139
      %s143 = sphi 0, %s142
      %s159 = sphi 0, %s143
    $region4: #{tpu_custom_call.1} parent=1 // loop_header_branch
      %22 = sbr.rel (%p20) target = $region8
    $region5: #{tpu_custom_call.1} parent=1 // loop_body
      %s24 = ssub.s32 %s19, 1
      %s25 = ssub.s32 %s19, 2
      %s26 = sadd.s32 %s19, 1
      %s27 = ssub.s32 %s19, %s26
      %p28 = scmp.eq.s32.totalorder %s27, 0
      %s30 = sadd.s32 %s29, 1
      %s31 = scalar_select %p28, %s29, %s30
      %p34 = pneg %p28
      %p35 = scmp.eq.s32.totalorder %s19, 1
      %p36 = por %p34, %p35
      %p37 = scmp.ne.s32.totalorder %s29, %s32
      %p38 = scmp.eq.s32.totalorder %s19, 0
      %p39 = por %p37, %p38
      %p40 = scmp.ne.s32.totalorder %s29, %s32
      %p41 = scmp.eq.s32.totalorder %s24, 1
      %p42 = por %p40, %p41
      %p43 = scmp.ne.s32.totalorder %s32, %s33
      %p44 = scmp.eq.s32.totalorder %s24, 0
      %p45 = por %p43, %p44
      %p46 = scmp.ne.s32.totalorder %s32, %s33
      %p47 = scmp.eq.s32.totalorder %s25, 1
      %p48 = por %p46, %p47
      %p50 = scmp.ne.s32.totalorder %s33, %s49
      %p51 = scmp.eq.s32.totalorder %s25, 0
      %p52 = por %p50, %p51
      %s54 = sadd.s32 %s53, 1
      %p57 = scmp.eq.s32.totalorder %s19, 1
      %p58 = scmp.ne.s32.totalorder %s53, %s55
      %p59 = scmp.eq.s32.totalorder %s19, 0
      %p60 = por %p58, %p59
      %p61 = scmp.ne.s32.totalorder %s53, %s55
      %p62 = scmp.eq.s32.totalorder %s24, 1
      %p63 = por %p61, %p62
      %p64 = scmp.ne.s32.totalorder %s55, %s56
      %p65 = scmp.eq.s32.totalorder %s24, 0
      %p66 = por %p64, %p65
      %p67 = scmp.ne.s32.totalorder %s55, %s56
      %p68 = scmp.eq.s32.totalorder %s25, 1
      %p69 = por %p67, %p68
      %p71 = scmp.ne.s32.totalorder %s56, %s70
      %p72 = scmp.eq.s32.totalorder %s25, 0
      %p73 = por %p71, %p72
      %s75 = sadd.s32 %s74, 1
      %p78 = scmp.eq.s32.totalorder %s19, 1
      %p79 = scmp.ne.s32.totalorder %s74, %s76
      %p80 = scmp.eq.s32.totalorder %s19, 0
      %p81 = por %p79, %p80
      %p82 = scmp.ne.s32.totalorder %s74, %s76
      %p83 = scmp.eq.s32.totalorder %s24, 1
      %p84 = por %p82, %p83
      %p85 = scmp.ne.s32.totalorder %s76, %s77
      %p86 = scmp.eq.s32.totalorder %s24, 0
      %p87 = por %p85, %p86
      %p88 = scmp.ne.s32.totalorder %s76, %s77
      %p89 = scmp.eq.s32.totalorder %s25, 1
      %p90 = por %p88, %p89
      %p92 = scmp.ne.s32.totalorder %s77, %s91
      %p93 = scmp.eq.s32.totalorder %s25, 0
      %p94 = por %p92, %p93
      %s96 = sadd.s32 %s95, 1
      %p99 = scmp.eq.s32.totalorder %s19, 1
      %p100 = scmp.ne.s32.totalorder %s95, %s97
      %p101 = scmp.eq.s32.totalorder %s19, 0
      %p102 = por %p100, %p101
      %p103 = scmp.ne.s32.totalorder %s95, %s97
      %p104 = scmp.eq.s32.totalorder %s24, 1
      %p105 = por %p103, %p104
      %p106 = scmp.ne.s32.totalorder %s97, %s98
      %p107 = scmp.eq.s32.totalorder %s24, 0
      %p108 = por %p106, %p107
      %p109 = scmp.ne.s32.totalorder %s97, %s98
      %p110 = scmp.eq.s32.totalorder %s25, 1
      %p111 = por %p109, %p110
      %p113 = scmp.ne.s32.totalorder %s98, %s112
      %p114 = scmp.eq.s32.totalorder %s25, 0
      %p115 = por %p113, %p114
      %s117 = sadd.s32 %s116, 1
      %p120 = scmp.eq.s32.totalorder %s19, 1
      %p121 = scmp.ne.s32.totalorder %s116, %s118
      %p122 = scmp.eq.s32.totalorder %s19, 0
      %p123 = por %p121, %p122
      %p124 = scmp.ne.s32.totalorder %s116, %s118
      %p125 = scmp.eq.s32.totalorder %s24, 1
      %p126 = por %p124, %p125
      %p127 = scmp.ne.s32.totalorder %s118, %s119
      %p128 = scmp.eq.s32.totalorder %s24, 0
      %p129 = por %p127, %p128
      %p130 = scmp.ne.s32.totalorder %s118, %s119
      %p131 = scmp.eq.s32.totalorder %s25, 1
      %p132 = por %p130, %p131
      %p134 = scmp.ne.s32.totalorder %s119, %s133
      %p135 = scmp.eq.s32.totalorder %s25, 0
      %p136 = por %p134, %p135
      %s137 = ssub.s32 %s19, %s26
      %p138 = scmp.eq.s32.totalorder %s137, 0
      %s140 = sadd.s32 %s139, 1
      %s141 = scalar_select %p138, %s139, %s140
      %p144 = pneg %p138
      %p145 = scmp.eq.s32.totalorder %s19, 1
      %p146 = por %p144, %p145
      %p147 = scmp.ne.s32.totalorder %s139, %s142
      %p148 = scmp.eq.s32.totalorder %s19, 0
      %p149 = por %p147, %p148
      %p150 = scmp.ne.s32.totalorder %s139, %s142
      %p151 = scmp.eq.s32.totalorder %s24, 1
      %p152 = por %p150, %p151
      %p153 = scmp.ne.s32.totalorder %s142, %s143
      %p154 = scmp.eq.s32.totalorder %s24, 0
      %p155 = por %p153, %p154
      %p156 = scmp.ne.s32.totalorder %s142, %s143
      %p157 = scmp.eq.s32.totalorder %s25, 1
      %p158 = por %p156, %p157
      %p160 = scmp.ne.s32.totalorder %s143, %s159
      %p161 = scmp.eq.s32.totalorder %s25, 0
      %p162 = por %p160, %p161
      %p163 = scmp.le.s32.totalorder 1, %s19
      %p164 = scmp.lt.s32.totalorder %s19, 3
      %p165 = pnand %p163, %p164
      %p166 = pneg %p165
      // Predicated region
      $region9: #{tpu_custom_call.1} parent=5 // pred_check
        _
      $region10: #{tpu_custom_call.1} parent=5 // pred_check_branch
        %168 = sbr.rel (%p165) target = $region12
      $region11: #{tpu_custom_call.1} parent=5 // pred_region
        %s169 = ssub.s32 %s19, 1
        // Predicated region
        $region13: #{tpu_custom_call.1} parent=11 // pred_check
          %p170 = pneg %p66
        $region14: #{tpu_custom_call.1} parent=11 // pred_check_branch
          %172 = sbr.rel (%p170) target = $region16
        $region15: #{tpu_custom_call.1} parent=11 // pred_region
          %174 = vsyncadd [#allocation8], 0
          %s175 = sshll.u32 %s1, 4
          %s176 = int_to_ptr.hbm [resolvable:$true] %s175
          %s177 = sshll.u32 [#allocation7], 4
          %s178 = int_to_ptr.vmem [resolvable:$true] %s177
          %183 = dma.hbm_to_vmem [thread:$0]  %s176, 4608, %s178, [#allocation8], 128, 128, 8
        $region16: #{tpu_custom_call.1} parent=11 // pred_fallthru
          _
        // Predicated region
        $region17: #{tpu_custom_call.1} parent=11 // pred_check
          %p184 = pneg %p87
        $region18: #{tpu_custom_call.1} parent=11 // pred_check_branch
          %186 = sbr.rel (%p184) target = $region20
        $region19: #{tpu_custom_call.1} parent=11 // pred_region
          %188 = vsyncadd [#allocation8], 0
          %s190 = sshll.u32 %s2, 4
          %s191 = int_to_ptr.hbm [resolvable:$true] %s190
          %s192 = sshll.u32 [#allocation9], 4
          %s193 = int_to_ptr.vmem [resolvable:$true] %s192
          %195 = dma.hbm_to_vmem [thread:$0]  %s191, 32, %s193, [#allocation8]
        $region20: #{tpu_custom_call.1} parent=11 // pred_fallthru
          _
        // Predicated region
        $region21: #{tpu_custom_call.1} parent=11 // pred_check
          %p196 = pneg %p108
        $region22: #{tpu_custom_call.1} parent=11 // pred_check_branch
          %198 = sbr.rel (%p196) target = $region24
        $region23: #{tpu_custom_call.1} parent=11 // pred_region
          %200 = vsyncadd [#allocation11], 0
          %s201 = sshll.u32 %s3, 4
          %s202 = int_to_ptr.hbm [resolvable:$true] %s201
          %s203 = sshll.u32 [#allocation10], 4
          %s204 = int_to_ptr.vmem [resolvable:$true] %s203
          %209 = dma.hbm_to_vmem [thread:$0]  %s202, 6144, %s204, [#allocation11], 128, 128, 8
        $region24: #{tpu_custom_call.1} parent=11 // pred_fallthru
          _
        // Predicated region
        $region25: #{tpu_custom_call.1} parent=11 // pred_check
          %p210 = pneg %p129
        $region26: #{tpu_custom_call.1} parent=11 // pred_check_branch
          %212 = sbr.rel (%p210) target = $region28
        $region27: #{tpu_custom_call.1} parent=11 // pred_region
          _
        $region28: #{tpu_custom_call.1} parent=11 // pred_fallthru
          _
      $region12: #{tpu_custom_call.1} parent=5 // pred_fallthru
        _
      %p213 = scmp.lt.s32.totalorder %s19, 2
      // Predicated region
      $region29: #{tpu_custom_call.1} parent=5 // pred_check
        %p214 = pneg %p213
      $region30: #{tpu_custom_call.1} parent=5 // pred_check_branch
        %216 = sbr.rel (%p214) target = $region32
      $region31: #{tpu_custom_call.1} parent=5 // pred_region
        // Predicated region
        $region33: #{tpu_custom_call.1} parent=31 // pred_check
          %p217 = pneg %p39
        $region34: #{tpu_custom_call.1} parent=31 // pred_check_branch
          %219 = sbr.rel (%p217) target = $region36
        $region35: #{tpu_custom_call.1} parent=31 // pred_region
          %s220 = sand.u32 %s29, 1
          %s221 = scalar_lea.sflag [#allocation5], %s220
          %s222 = sand.u32 %s29, 1
          %s223 = smul.addr %s222, 32
          %s224 = scalar_lea.vmem [#allocation4], %s223
          %226 = vsyncadd %s221, 0
          %s227 = smul.addr %s19, 4
          %s228 = smul.addr %s227, 8
          %s229 = scalar_lea.hbm %s0, %s228
          %s230 = sshll.u32 %s229, 4
          %s231 = int_to_ptr.hbm [resolvable:$true] %s230
          %s232 = sshll.u32 %s224, 4
          %s233 = int_to_ptr.vmem [resolvable:$true] %s232
          %238 = dma.hbm_to_vmem [thread:$0]  %s231, 512, %s233, %s221, 128, 128, 8
        $region36: #{tpu_custom_call.1} parent=31 // pred_fallthru
          _
      $region32: #{tpu_custom_call.1} parent=5 // pred_fallthru
        _
      %p239 = scmp.le.s32.totalorder 1, %s19
      %p240 = scmp.lt.s32.totalorder %s19, 3
      %p241 = pnand %p239, %p240
      %p242 = pneg %p241
      // Predicated region
      $region37: #{tpu_custom_call.1} parent=5 // pred_check
        _
      $region38: #{tpu_custom_call.1} parent=5 // pred_check_branch
        %244 = sbr.rel (%p241) target = $region40
      $region39: #{tpu_custom_call.1} parent=5 // pred_region
        %s245 = ssub.s32 %s19, 1
        %s246 = sand.u32 %s32, 1
        %s247 = scalar_lea.sflag [#allocation5], %s246
        %s248 = sand.u32 %s32, 1
        %s249 = smul.addr %s248, 32
        %s250 = scalar_lea.vmem [#allocation4], %s249
        // Predicated region
        $region41: #{tpu_custom_call.1} parent=39 // pred_check
          %p251 = pneg %p45
        $region42: #{tpu_custom_call.1} parent=39 // pred_check_branch
          %253 = sbr.rel (%p251) target = $region44
        $region43: #{tpu_custom_call.1} parent=39 // pred_region
          %255 = dma.done %s247, 512
        $region44: #{tpu_custom_call.1} parent=39 // pred_fallthru
          _
        // Predicated region
        $region45: #{tpu_custom_call.1} parent=39 // pred_check
          %p256 = pneg %p66
        $region46: #{tpu_custom_call.1} parent=39 // pred_check_branch
          %258 = sbr.rel (%p256) target = $region48
        $region47: #{tpu_custom_call.1} parent=39 // pred_region
          %260 = dma.done [#allocation8], 4608
        $region48: #{tpu_custom_call.1} parent=39 // pred_fallthru
          _
        // Predicated region
        $region49: #{tpu_custom_call.1} parent=39 // pred_check
          %p261 = pneg %p87
        $region50: #{tpu_custom_call.1} parent=39 // pred_check_branch
          %263 = sbr.rel (%p261) target = $region52
        $region51: #{tpu_custom_call.1} parent=39 // pred_region
          %265 = dma.done [#allocation8], 32
        $region52: #{tpu_custom_call.1} parent=39 // pred_fallthru
          _
        // Predicated region
        $region53: #{tpu_custom_call.1} parent=39 // pred_check
          %p266 = pneg %p108
        $region54: #{tpu_custom_call.1} parent=39 // pred_check_branch
          %268 = sbr.rel (%p266) target = $region56
        $region55: #{tpu_custom_call.1} parent=39 // pred_region
          %270 = dma.done [#allocation11], 6144
        $region56: #{tpu_custom_call.1} parent=39 // pred_fallthru
          _
        %s271 = sand.u32 %s32, 1
        %s272 = scalar_lea.sflag [#allocation5], %s271
        %s273 = sand.u32 %s32, 1
        %s274 = smul.addr %s273, 32
        %s275 = scalar_lea.vmem [#allocation4], %s274
        %p276 = pneg %p45
        %p277 = pneg %p42
        %p278 = pneg %p66
        %p279 = pneg %p63
        %p280 = pneg %p87
        %p281 = pneg %p84
        %p282 = pneg %p108
        %p283 = pneg %p105
        %p284 = pneg %p129
        %p285 = pneg %p126
        %p286 = pneg %p155
        %p287 = pneg %p152
        %s288 = sand.u32 %s142, 1
        %s289 = scalar_lea.sflag [#allocation6], %s288
        %s290 = sand.u32 %s142, 1
        %s291 = smul.addr %s290, 8
        %s292 = scalar_lea.vmem [#allocation12], %s291
        %vm294 = vcmask 778240
        %295 = vst.msk [vmem:[#allocation2] sm:$0x1] %vm294, 0.0
        %296 = vst.msk [vmem:[#allocation2 + $0x21] sm:$0x1] %vm294, 0.0
        %v297 = vld [vmem:[%s250] sm:$0xff]
        %v298 = vld [vmem:[%s250 + $0x8] sm:$0xff]
        %v299 = vld [vmem:[%s250 + $0x10] sm:$0xff]
        %v300 = vld [vmem:[%s250 + $0x18] sm:$0xff]
        %vm301 = vcmask 785408
        %302 = vst.msk [vmem:[#allocation2 + $0x1] sm:$0xff] %vm301, %v297
        %303 = vst.msk [vmem:[#allocation2 + $0x9] sm:$0xff] %vm301, %v298
        %304 = vst.msk [vmem:[#allocation2 + $0x11] sm:$0xff] %vm301, %v299
        %305 = vst.msk [vmem:[#allocation2 + $0x19] sm:$0xff] %vm301, %v300
        %v306 = vld [vmem:[#allocation2] sm:$0xff]
        %v307 = vld [vmem:[#allocation2 + $0x8] sm:$0xff]
        %v308 = vld [vmem:[#allocation2 + $0x10] sm:$0xff]
        %v309 = vld [vmem:[#allocation2 + $0x18] sm:$0xff]
        %v310 = vpack.c.bf16 %v307, %v306
        %v311 = vpack.c.bf16 %v309, %v308
        %v312 = vld [vmem:[#allocation7] sm:$0xff]
        %v313 = vld [vmem:[#allocation7 + $0x8] sm:$0xff]
        %v314 = vld [vmem:[#allocation7 + $0x10] sm:$0xff]
        %v315 = vld [vmem:[#allocation7 + $0x18] sm:$0xff]
        %v316 = vld [vmem:[#allocation7 + $0x20] sm:$0xff]
        %v317 = vld [vmem:[#allocation7 + $0x28] sm:$0xff]
        %v318 = vld [vmem:[#allocation7 + $0x30] sm:$0xff]
        %v319 = vld [vmem:[#allocation7 + $0x38] sm:$0xff]
        %v320 = vld [vmem:[#allocation7 + $0x40] sm:$0xff]
        %v321 = vld [vmem:[#allocation7 + $0x48] sm:$0xff]
        %v322 = vld [vmem:[#allocation7 + $0x50] sm:$0xff]
        %v323 = vld [vmem:[#allocation7 + $0x58] sm:$0xff]
        %v324 = vld [vmem:[#allocation2 + $0x1] sm:$0xff]
        %v325 = vld [vmem:[#allocation2 + $0x9] sm:$0xff]
        %v326 = vld [vmem:[#allocation2 + $0x11] sm:$0xff]
        %v327 = vld [vmem:[#allocation2 + $0x19] sm:$0xff]
        %v328 = vpack.c.bf16 %v325, %v324
        %v329 = vpack.c.bf16 %v327, %v326
        %s330 = scalar_lea.vmem [#allocation7], 96
        %v331 = vld [vmem:[%s330] sm:$0xff]
        %v332 = vld [vmem:[%s330 + $0x8] sm:$0xff]
        %v333 = vld [vmem:[%s330 + $0x10] sm:$0xff]
        %v334 = vld [vmem:[%s330 + $0x18] sm:$0xff]
        %v335 = vld [vmem:[%s330 + $0x20] sm:$0xff]
        %v336 = vld [vmem:[%s330 + $0x28] sm:$0xff]
        %v337 = vld [vmem:[%s330 + $0x30] sm:$0xff]
        %v338 = vld [vmem:[%s330 + $0x38] sm:$0xff]
        %v339 = vld [vmem:[%s330 + $0x40] sm:$0xff]
        %v340 = vld [vmem:[%s330 + $0x48] sm:$0xff]
        %v341 = vld [vmem:[%s330 + $0x50] sm:$0xff]
        %v342 = vld [vmem:[%s330 + $0x58] sm:$0xff]
        %v355 = vunpack.c.l.b16 %v331
        %v356 = vunpack.c.h.b16 %v331
        %v357 = vunpack.c.l.b16 %v332
        %v358 = vunpack.c.h.b16 %v332
        %v359 = vunpack.c.l.b16 %v333
        %v360 = vunpack.c.h.b16 %v333
        %v361 = vunpack.c.l.b16 %v334
        %v362 = vunpack.c.h.b16 %v334
        %v363 = vunpack.c.l.b16 %v335
        %v364 = vunpack.c.h.b16 %v335
        %v365 = vunpack.c.l.b16 %v336
        %v366 = vunpack.c.h.b16 %v336
        %v367 = vunpack.c.l.b16 %v337
        %v368 = vunpack.c.h.b16 %v337
        %v369 = vunpack.c.l.b16 %v338
        %v370 = vunpack.c.h.b16 %v338
        %v371 = vunpack.c.l.b16 %v339
        %v372 = vunpack.c.h.b16 %v339
        %v373 = vunpack.c.l.b16 %v340
        %v374 = vunpack.c.h.b16 %v340
        %v375 = vunpack.c.l.b16 %v341
        %v376 = vunpack.c.h.b16 %v341
        %v377 = vunpack.c.l.b16 %v342
        %v378 = vunpack.c.h.b16 %v342
        %v379 = vpack.c.b16 %v357, %v355
        %v380 = vpack.c.b16 %v358, %v356
        %v381 = vpack.c.b16 %v361, %v359
        %v382 = vpack.c.b16 %v362, %v360
        %v383 = vpack.c.b16 %v365, %v363
        %v384 = vpack.c.b16 %v366, %v364
        %v385 = vpack.c.b16 %v369, %v367
        %v386 = vpack.c.b16 %v370, %v368
        %v387 = vpack.c.b16 %v373, %v371
        %v388 = vpack.c.b16 %v374, %v372
        %v389 = vpack.c.b16 %v377, %v375
        %v390 = vpack.c.b16 %v378, %v376
        %v404 = vsel %vm301, %v328, 0
        %v407 = vsel %vm301, %v329, 0
        %409 = vmatpush.bf16.msra.mxu0 0
        %410 = vmatpush.bf16.msra.mxu0 0
        %411 = vmatpush.bf16.msra.mxu0 %v389
        %412 = vmatpush.bf16.msra.mxu0 %v387
        %413 = vmatpush.bf16.msra.mxu0 %v385
        %414 = vmatpush.bf16.msra.mxu0 %v383
        %415 = vmatpush.bf16.msra.mxu0 %v381
        %416 = vmatpush.bf16.msra.mxu0 %v379
        %417 = vmatmul.bf16.gmra.mxu0 %v404
        %v418 = vpop.f32.mrf.mxu0
        %v419 = vadd.f32 0.0, %v418
        %v420 = vpop.f32.mrf.mxu0
        %v421 = vadd.f32 0.0, %v420
        %422 = vmatmul.bf16.gmra.mxu0 %v407
        %v423 = vpop.f32.mrf.mxu0
        %v424 = vadd.f32 0.0, %v423
        %v425 = vpop.f32.mrf.mxu0
        %v426 = vadd.f32 0.0, %v425
        %427 = vdwg.mxu0
        %428 = vmatpush.bf16.msra.mxu0 0
        %429 = vmatpush.bf16.msra.mxu0 0
        %430 = vmatpush.bf16.msra.mxu0 %v390
        %431 = vmatpush.bf16.msra.mxu0 %v388
        %432 = vmatpush.bf16.msra.mxu0 %v386
        %433 = vmatpush.bf16.msra.mxu0 %v384
        %434 = vmatpush.bf16.msra.mxu0 %v382
        %435 = vmatpush.bf16.msra.mxu0 %v380
        %436 = vmatmul.bf16.gmra.mxu0 %v404
        %v437 = vpop.f32.mrf.mxu0
        %v438 = vadd.f32 0.0, %v437
        %v439 = vpop.f32.mrf.mxu0
        %v440 = vadd.f32 0.0, %v439
        %441 = vmatmul.bf16.gmra.mxu0 %v407
        %v442 = vpop.f32.mrf.mxu0
        %v443 = vadd.f32 0.0, %v442
        %v444 = vpop.f32.mrf.mxu0
        %v445 = vadd.f32 0.0, %v444
        %446 = vdwg.mxu0
        %v459 = vunpack.c.l.b16 %v312
        %v460 = vunpack.c.h.b16 %v312
        %v461 = vunpack.c.l.b16 %v313
        %v462 = vunpack.c.h.b16 %v313
        %v463 = vunpack.c.l.b16 %v314
        %v464 = vunpack.c.h.b16 %v314
        %v465 = vunpack.c.l.b16 %v315
        %v466 = vunpack.c.h.b16 %v315
        %v467 = vunpack.c.l.b16 %v316
        %v468 = vunpack.c.h.b16 %v316
        %v469 = vunpack.c.l.b16 %v317
        %v470 = vunpack.c.h.b16 %v317
        %v471 = vunpack.c.l.b16 %v318
        %v472 = vunpack.c.h.b16 %v318
        %v473 = vunpack.c.l.b16 %v319
        %v474 = vunpack.c.h.b16 %v319
        %v475 = vunpack.c.l.b16 %v320
        %v476 = vunpack.c.h.b16 %v320
        %v477 = vunpack.c.l.b16 %v321
        %v478 = vunpack.c.h.b16 %v321
        %v479 = vunpack.c.l.b16 %v322
        %v480 = vunpack.c.h.b16 %v322
        %v481 = vunpack.c.l.b16 %v323
        %v482 = vunpack.c.h.b16 %v323
        %v483 = vpack.c.b16 %v461, %v459
        %v484 = vpack.c.b16 %v462, %v460
        %v485 = vpack.c.b16 %v465, %v463
        %v486 = vpack.c.b16 %v466, %v464
        %v487 = vpack.c.b16 %v469, %v467
        %v488 = vpack.c.b16 %v470, %v468
        %v489 = vpack.c.b16 %v473, %v471
        %v490 = vpack.c.b16 %v474, %v472
        %v491 = vpack.c.b16 %v477, %v475
        %v492 = vpack.c.b16 %v478, %v476
        %v493 = vpack.c.b16 %v481, %v479
        %v494 = vpack.c.b16 %v482, %v480
        %v508 = vsel %vm301, %v310, 0
        %v511 = vsel %vm301, %v311, 0
        %513 = vmatpush.bf16.msra.mxu0 0
        %514 = vmatpush.bf16.msra.mxu0 0
        %515 = vmatpush.bf16.msra.mxu0 %v493
        %516 = vmatpush.bf16.msra.mxu0 %v491
        %517 = vmatpush.bf16.msra.mxu0 %v489
        %518 = vmatpush.bf16.msra.mxu0 %v487
        %519 = vmatpush.bf16.msra.mxu0 %v485
        %520 = vmatpush.bf16.msra.mxu0 %v483
        %521 = vmatmul.bf16.gmra.mxu0 %v508
        %v522 = vpop.f32.mrf.mxu0
        %v523 = vadd.f32 %v419, %v522
        %v524 = vpop.f32.mrf.mxu0
        %v525 = vadd.f32 %v421, %v524
        %526 = vmatmul.bf16.gmra.mxu0 %v511
        %v527 = vpop.f32.mrf.mxu0
        %v528 = vadd.f32 %v424, %v527
        %v529 = vpop.f32.mrf.mxu0
        %v530 = vadd.f32 %v426, %v529
        %531 = vdwg.mxu0
        %532 = vmatpush.bf16.msra.mxu0 0
        %533 = vmatpush.bf16.msra.mxu0 0
        %534 = vmatpush.bf16.msra.mxu0 %v494
        %535 = vmatpush.bf16.msra.mxu0 %v492
        %536 = vmatpush.bf16.msra.mxu0 %v490
        %537 = vmatpush.bf16.msra.mxu0 %v488
        %538 = vmatpush.bf16.msra.mxu0 %v486
        %539 = vmatpush.bf16.msra.mxu0 %v484
        %540 = vmatmul.bf16.gmra.mxu0 %v508
        %v541 = vpop.f32.mrf.mxu0
        %v542 = vadd.f32 %v438, %v541
        %v543 = vpop.f32.mrf.mxu0
        %v544 = vadd.f32 %v440, %v543
        %545 = vmatmul.bf16.gmra.mxu0 %v511
        %v546 = vpop.f32.mrf.mxu0
        %v547 = vadd.f32 %v443, %v546
        %v548 = vpop.f32.mrf.mxu0
        %v549 = vadd.f32 %v445, %v548
        %550 = vdwg.mxu0
        %v551 = vld [vmem:[#allocation2 + $0x2] sm:$0xff]
        %v552 = vld [vmem:[#allocation2 + $0xa] sm:$0xff]
        %v553 = vld [vmem:[#allocation2 + $0x12] sm:$0xff]
        %v554 = vld [vmem:[#allocation2 + $0x1a] sm:$0xff]
        %v555 = vpack.c.bf16 %v552, %v551
        %v556 = vpack.c.bf16 %v554, %v553
        %s557 = scalar_lea.vmem [#allocation7], 192
        %v558 = vld [vmem:[%s557] sm:$0xff]
        %v559 = vld [vmem:[%s557 + $0x8] sm:$0xff]
        %v560 = vld [vmem:[%s557 + $0x10] sm:$0xff]
        %v561 = vld [vmem:[%s557 + $0x18] sm:$0xff]
        %v562 = vld [vmem:[%s557 + $0x20] sm:$0xff]
        %v563 = vld [vmem:[%s557 + $0x28] sm:$0xff]
        %v564 = vld [vmem:[%s557 + $0x30] sm:$0xff]
        %v565 = vld [vmem:[%s557 + $0x38] sm:$0xff]
        %v566 = vld [vmem:[%s557 + $0x40] sm:$0xff]
        %v567 = vld [vmem:[%s557 + $0x48] sm:$0xff]
        %v568 = vld [vmem:[%s557 + $0x50] sm:$0xff]
        %v569 = vld [vmem:[%s557 + $0x58] sm:$0xff]
        %v582 = vunpack.c.l.b16 %v558
        %v583 = vunpack.c.h.b16 %v558
        %v584 = vunpack.c.l.b16 %v559
        %v585 = vunpack.c.h.b16 %v559
        %v586 = vunpack.c.l.b16 %v560
        %v587 = vunpack.c.h.b16 %v560
        %v588 = vunpack.c.l.b16 %v561
        %v589 = vunpack.c.h.b16 %v561
        %v590 = vunpack.c.l.b16 %v562
        %v591 = vunpack.c.h.b16 %v562
        %v592 = vunpack.c.l.b16 %v563
        %v593 = vunpack.c.h.b16 %v563
        %v594 = vunpack.c.l.b16 %v564
        %v595 = vunpack.c.h.b16 %v564
        %v596 = vunpack.c.l.b16 %v565
        %v597 = vunpack.c.h.b16 %v565
        %v598 = vunpack.c.l.b16 %v566
        %v599 = vunpack.c.h.b16 %v566
        %v600 = vunpack.c.l.b16 %v567
        %v601 = vunpack.c.h.b16 %v567
        %v602 = vunpack.c.l.b16 %v568
        %v603 = vunpack.c.h.b16 %v568
        %v604 = vunpack.c.l.b16 %v569
        %v605 = vunpack.c.h.b16 %v569
        %v606 = vpack.c.b16 %v584, %v582
        %v607 = vpack.c.b16 %v585, %v583
        %v608 = vpack.c.b16 %v588, %v586
        %v609 = vpack.c.b16 %v589, %v587
        %v610 = vpack.c.b16 %v592, %v590
        %v611 = vpack.c.b16 %v593, %v591
        %v612 = vpack.c.b16 %v596, %v594
        %v613 = vpack.c.b16 %v597, %v595
        %v614 = vpack.c.b16 %v600, %v598
        %v615 = vpack.c.b16 %v601, %v599
        %v616 = vpack.c.b16 %v604, %v602
        %v617 = vpack.c.b16 %v605, %v603
        %v631 = vsel %vm301, %v555, 0
        %v634 = vsel %vm301, %v556, 0
        %636 = vmatpush.bf16.msra.mxu0 0
        %637 = vmatpush.bf16.msra.mxu0 0
        %638 = vmatpush.bf16.msra.mxu0 %v616
        %639 = vmatpush.bf16.msra.mxu0 %v614
        %640 = vmatpush.bf16.msra.mxu0 %v612
        %641 = vmatpush.bf16.msra.mxu0 %v610
        %642 = vmatpush.bf16.msra.mxu0 %v608
        %643 = vmatpush.bf16.msra.mxu0 %v606
        %644 = vmatmul.bf16.gmra.mxu0 %v631
        %v645 = vpop.f32.mrf.mxu0
        %v646 = vadd.f32 0.0, %v645
        %v647 = vpop.f32.mrf.mxu0
        %v648 = vadd.f32 0.0, %v647
        %649 = vmatmul.bf16.gmra.mxu0 %v634
        %v650 = vpop.f32.mrf.mxu0
        %v651 = vadd.f32 0.0, %v650
        %v652 = vpop.f32.mrf.mxu0
        %v653 = vadd.f32 0.0, %v652
        %654 = vdwg.mxu0
        %655 = vmatpush.bf16.msra.mxu0 0
        %656 = vmatpush.bf16.msra.mxu0 0
        %657 = vmatpush.bf16.msra.mxu0 %v617
        %658 = vmatpush.bf16.msra.mxu0 %v615
        %659 = vmatpush.bf16.msra.mxu0 %v613
        %660 = vmatpush.bf16.msra.mxu0 %v611
        %661 = vmatpush.bf16.msra.mxu0 %v609
        %662 = vmatpush.bf16.msra.mxu0 %v607
        %663 = vmatmul.bf16.gmra.mxu0 %v631
        %v664 = vpop.f32.mrf.mxu0
        %v665 = vadd.f32 0.0, %v664
        %v666 = vpop.f32.mrf.mxu0
        %v667 = vadd.f32 0.0, %v666
        %668 = vmatmul.bf16.gmra.mxu0 %v634
        %v669 = vpop.f32.mrf.mxu0
        %v670 = vadd.f32 0.0, %v669
        %v671 = vpop.f32.mrf.mxu0
        %v672 = vadd.f32 0.0, %v671
        %673 = vdwg.mxu0
        %v674 = vadd.f32 %v523, %v646
        %v675 = vadd.f32 %v542, %v665
        %v676 = vadd.f32 %v525, %v648
        %v677 = vadd.f32 %v544, %v667
        %v678 = vadd.f32 %v528, %v651
        %v679 = vadd.f32 %v547, %v670
        %v680 = vadd.f32 %v530, %v653
        %v681 = vadd.f32 %v549, %v672
        %v682 = vld [vmem:[#allocation9] sm:$0x3]
        %v684 = vperm.slane %v682, 0
        %v685 = vperm.slane %v682, 1
        %v688 = vadd.f32 %v674, %v684
        %v689 = vadd.f32 %v675, %v685
        %v690 = vadd.f32 %v676, %v684
        %v691 = vadd.f32 %v677, %v685
        %v692 = vadd.f32 %v678, %v684
        %v693 = vadd.f32 %v679, %v685
        %v694 = vadd.f32 %v680, %v684
        %v695 = vadd.f32 %v681, %v685
        %v696 = vmax.f32 %v688, 0.0
        %v697 = vmax.f32 %v689, 0.0
        %v698 = vmax.f32 %v690, 0.0
        %v699 = vmax.f32 %v691, 0.0
        %v700 = vmax.f32 %v692, 0.0
        %v701 = vmax.f32 %v693, 0.0
        %v702 = vmax.f32 %v694, 0.0
        %v703 = vmax.f32 %v695, 0.0
        %v712 = vrot.slane %v697, 6
        %v713 = vrot.slane %v699, 6
        %v714 = vrot.slane %v701, 6
        %v715 = vrot.slane %v703, 6
        %vm716 = vcmask 1041408
        %v717 = vsel %vm716, %v696, %v712
        %vm718 = vcmask 1043458
        %v719 = vsel %vm718, %v696, %v712
        %v720 = vrot.slane %v719, 2
        %vm721 = vcmask 1045508
        %v722 = vsel %vm721, %v696, %v712
        %v723 = vrot.slane %v722, 4
        %vm724 = vcmask 1045504
        %v725 = vsel %vm724, %v712, %v696
        %v726 = vrot.slane %v725, 6
        %v727 = vsel %vm716, %v698, %v713
        %v728 = vsel %vm718, %v698, %v713
        %v729 = vrot.slane %v728, 2
        %v730 = vsel %vm721, %v698, %v713
        %v731 = vrot.slane %v730, 4
        %v732 = vsel %vm724, %v713, %v698
        %v733 = vrot.slane %v732, 6
        %v734 = vsel %vm716, %v700, %v714
        %v735 = vsel %vm718, %v700, %v714
        %v736 = vrot.slane %v735, 2
        %v737 = vsel %vm721, %v700, %v714
        %v738 = vrot.slane %v737, 4
        %v739 = vsel %vm724, %v714, %v700
        %v740 = vrot.slane %v739, 6
        %v741 = vsel %vm716, %v702, %v715
        %v742 = vsel %vm718, %v702, %v715
        %v743 = vrot.slane %v742, 2
        %v744 = vsel %vm721, %v702, %v715
        %v745 = vrot.slane %v744, 4
        %v746 = vsel %vm724, %v715, %v702
        %v747 = vrot.slane %v746, 6
        %v764 = vrot.slane %v717, 7
        %v765 = vrot.slane %v764, 2
        %v766 = vrot.slane %v720, 7
        %v767 = vrot.slane %v766, 2
        %v768 = vrot.slane %v723, 7
        %v769 = vrot.slane %v768, 2
        %v770 = vrot.slane %v726, 7
        %v771 = vrot.slane %v770, 2
        %v772 = vrot.slane %v727, 7
        %v773 = vrot.slane %v772, 2
        %v774 = vrot.slane %v729, 7
        %v775 = vrot.slane %v774, 2
        %v776 = vrot.slane %v731, 7
        %v777 = vrot.slane %v776, 2
        %v778 = vrot.slane %v733, 7
        %v779 = vrot.slane %v778, 2
        %v780 = vrot.slane %v734, 7
        %v781 = vrot.slane %v780, 2
        %v782 = vrot.slane %v736, 7
        %v783 = vrot.slane %v782, 2
        %v784 = vrot.slane %v738, 7
        %v785 = vrot.slane %v784, 2
        %v786 = vrot.slane %v740, 7
        %v787 = vrot.slane %v786, 2
        %v788 = vrot.slane %v741, 7
        %v789 = vrot.slane %v788, 2
        %v790 = vrot.slane %v743, 7
        %v791 = vrot.slane %v790, 2
        %v792 = vrot.slane %v745, 7
        %v793 = vrot.slane %v792, 2
        %v794 = vrot.slane %v747, 7
        %v795 = vrot.slane %v794, 2
        %v812 = vmax.f32 %v717, %v765
        %v813 = vmax.f32 %v720, %v767
        %v814 = vmax.f32 %v723, %v769
        %v815 = vmax.f32 %v726, %v771
        %v816 = vmax.f32 %v727, %v773
        %v817 = vmax.f32 %v729, %v775
        %v818 = vmax.f32 %v731, %v777
        %v819 = vmax.f32 %v733, %v779
        %v820 = vmax.f32 %v734, %v781
        %v821 = vmax.f32 %v736, %v783
        %v822 = vmax.f32 %v738, %v785
        %v823 = vmax.f32 %v740, %v787
        %v824 = vmax.f32 %v741, %v789
        %v825 = vmax.f32 %v743, %v791
        %v826 = vmax.f32 %v745, %v793
        %v827 = vmax.f32 %v747, %v795
        %v844 = vrot.slane %v812, 2
        %v845 = vrot.slane %v813, 2
        %v846 = vrot.slane %v814, 2
        %v847 = vrot.slane %v815, 2
        %v848 = vrot.slane %v816, 2
        %v849 = vrot.slane %v817, 2
        %v850 = vrot.slane %v818, 2
        %v851 = vrot.slane %v819, 2
        %v852 = vrot.slane %v820, 2
        %v853 = vrot.slane %v821, 2
        %v854 = vrot.slane %v822, 2
        %v855 = vrot.slane %v823, 2
        %v856 = vrot.slane %v824, 2
        %v857 = vrot.slane %v825, 2
        %v858 = vrot.slane %v826, 2
        %v859 = vrot.slane %v827, 2
        %v876 = vmax.f32 %v812, %v844
        %v877 = vmax.f32 %v813, %v845
        %v878 = vmax.f32 %v814, %v846
        %v879 = vmax.f32 %v815, %v847
        %v880 = vmax.f32 %v816, %v848
        %v881 = vmax.f32 %v817, %v849
        %v882 = vmax.f32 %v818, %v850
        %v883 = vmax.f32 %v819, %v851
        %v884 = vmax.f32 %v820, %v852
        %v885 = vmax.f32 %v821, %v853
        %v886 = vmax.f32 %v822, %v854
        %v887 = vmax.f32 %v823, %v855
        %v888 = vmax.f32 %v824, %v856
        %v889 = vmax.f32 %v825, %v857
        %v890 = vmax.f32 %v826, %v858
        %v891 = vmax.f32 %v827, %v859
        %892 = vst [vmem:[#allocation3] sm:$0x1] 0.0
        %893 = vst [vmem:[#allocation3 + $0x11] sm:$0x1] 0.0
        %v910 = vperm.slane %v876, 0
        %v911 = vperm.slane %v877, 0
        %v912 = vperm.slane %v878, 0
        %v913 = vperm.slane %v879, 0
        %v914 = vperm.slane %v880, 0
        %v915 = vperm.slane %v881, 0
        %v916 = vperm.slane %v882, 0
        %v917 = vperm.slane %v883, 0
        %v918 = vperm.slane %v884, 0
        %v919 = vperm.slane %v885, 0
        %v920 = vperm.slane %v886, 0
        %v921 = vperm.slane %v887, 0
        %v922 = vperm.slane %v888, 0
        %v923 = vperm.slane %v889, 0
        %v924 = vperm.slane %v890, 0
        %v925 = vperm.slane %v891, 0
        %vm926 = vcmask 1041409
        %v927 = vsel %vm926, %v911, %v910
        %vm928 = vcmask 1042434
        %v929 = vsel %vm928, %v912, %v927
        %vm930 = vcmask 1043459
        %v931 = vsel %vm930, %v913, %v929
        %vm932 = vcmask 1044484
        %v933 = vsel %vm932, %v914, %v931
        %vm934 = vcmask 1045509
        %v935 = vsel %vm934, %v915, %v933
        %vm936 = vcmask 1046534
        %v937 = vsel %vm936, %v916, %v935
        %vm938 = vcmask 1047559
        %v939 = vsel %vm938, %v917, %v937
        %v940 = vsel %vm926, %v919, %v918
        %v941 = vsel %vm928, %v920, %v940
        %v942 = vsel %vm930, %v921, %v941
        %v943 = vsel %vm932, %v922, %v942
        %v944 = vsel %vm934, %v923, %v943
        %v945 = vsel %vm936, %v924, %v944
        %v946 = vsel %vm938, %v925, %v945
        %949 = vst [vmem:[#allocation3 + $0x1] sm:$0xff] %v939
        %950 = vst [vmem:[#allocation3 + $0x9] sm:$0xff] %v946
        %v951 = vld [vmem:[#allocation3] sm:$0xff]
        %v952 = vld [vmem:[#allocation3 + $0x8] sm:$0xff]
        %v953 = vpack.c.bf16 %v952, %v951
        %v954 = vld [vmem:[#allocation10] sm:$0xff]
        %v955 = vld [vmem:[#allocation10 + $0x8] sm:$0xff]
        %v956 = vld [vmem:[#allocation10 + $0x10] sm:$0xff]
        %v957 = vld [vmem:[#allocation10 + $0x18] sm:$0xff]
        %v958 = vld [vmem:[#allocation10 + $0x20] sm:$0xff]
        %v959 = vld [vmem:[#allocation10 + $0x28] sm:$0xff]
        %v960 = vld [vmem:[#allocation10 + $0x30] sm:$0xff]
        %v961 = vld [vmem:[#allocation10 + $0x38] sm:$0xff]
        %v962 = vld [vmem:[#allocation10 + $0x40] sm:$0xff]
        %v963 = vld [vmem:[#allocation10 + $0x48] sm:$0xff]
        %v964 = vld [vmem:[#allocation10 + $0x50] sm:$0xff]
        %v965 = vld [vmem:[#allocation10 + $0x58] sm:$0xff]
        %v966 = vld [vmem:[#allocation10 + $0x60] sm:$0xff]
        %v967 = vld [vmem:[#allocation10 + $0x68] sm:$0xff]
        %v968 = vld [vmem:[#allocation10 + $0x70] sm:$0xff]
        %v969 = vld [vmem:[#allocation10 + $0x78] sm:$0xff]
        %v970 = vld [vmem:[#allocation3 + $0x1] sm:$0xff]
        %v971 = vld [vmem:[#allocation3 + $0x9] sm:$0xff]
        %v972 = vpack.c.bf16 %v971, %v970
        %s973 = scalar_lea.vmem [#allocation10], 128
        %v974 = vld [vmem:[%s973] sm:$0xff]
        %v975 = vld [vmem:[%s973 + $0x8] sm:$0xff]
        %v976 = vld [vmem:[%s973 + $0x10] sm:$0xff]
        %v977 = vld [vmem:[%s973 + $0x18] sm:$0xff]
        %v978 = vld [vmem:[%s973 + $0x20] sm:$0xff]
        %v979 = vld [vmem:[%s973 + $0x28] sm:$0xff]
        %v980 = vld [vmem:[%s973 + $0x30] sm:$0xff]
        %v981 = vld [vmem:[%s973 + $0x38] sm:$0xff]
        %v982 = vld [vmem:[%s973 + $0x40] sm:$0xff]
        %v983 = vld [vmem:[%s973 + $0x48] sm:$0xff]
        %v984 = vld [vmem:[%s973 + $0x50] sm:$0xff]
        %v985 = vld [vmem:[%s973 + $0x58] sm:$0xff]
        %v986 = vld [vmem:[%s973 + $0x60] sm:$0xff]
        %v987 = vld [vmem:[%s973 + $0x68] sm:$0xff]
        %v988 = vld [vmem:[%s973 + $0x70] sm:$0xff]
        %v989 = vld [vmem:[%s973 + $0x78] sm:$0xff]
        %v1006 = vunpack.c.l.b16 %v974
        %v1007 = vunpack.c.h.b16 %v974
        %v1008 = vunpack.c.l.b16 %v975
        %v1009 = vunpack.c.h.b16 %v975
        %v1010 = vunpack.c.l.b16 %v976
        %v1011 = vunpack.c.h.b16 %v976
        %v1012 = vunpack.c.l.b16 %v977
        %v1013 = vunpack.c.h.b16 %v977
        %v1014 = vunpack.c.l.b16 %v978
        %v1015 = vunpack.c.h.b16 %v978
        %v1016 = vunpack.c.l.b16 %v979
        %v1017 = vunpack.c.h.b16 %v979
        %v1018 = vunpack.c.l.b16 %v980
        %v1019 = vunpack.c.h.b16 %v980
        %v1020 = vunpack.c.l.b16 %v981
        %v1021 = vunpack.c.h.b16 %v981
        %v1022 = vunpack.c.l.b16 %v982
        %v1023 = vunpack.c.h.b16 %v982
        %v1024 = vunpack.c.l.b16 %v983
        %v1025 = vunpack.c.h.b16 %v983
        %v1026 = vunpack.c.l.b16 %v984
        %v1027 = vunpack.c.h.b16 %v984
        %v1028 = vunpack.c.l.b16 %v985
        %v1029 = vunpack.c.h.b16 %v985
        %v1030 = vunpack.c.l.b16 %v986
        %v1031 = vunpack.c.h.b16 %v986
        %v1032 = vunpack.c.l.b16 %v987
        %v1033 = vunpack.c.h.b16 %v987
        %v1034 = vunpack.c.l.b16 %v988
        %v1035 = vunpack.c.h.b16 %v988
        %v1036 = vunpack.c.l.b16 %v989
        %v1037 = vunpack.c.h.b16 %v989
        %v1038 = vpack.c.b16 %v1008, %v1006
        %v1039 = vpack.c.b16 %v1009, %v1007
        %v1040 = vpack.c.b16 %v1012, %v1010
        %v1041 = vpack.c.b16 %v1013, %v1011
        %v1042 = vpack.c.b16 %v1016, %v1014
        %v1043 = vpack.c.b16 %v1017, %v1015
        %v1044 = vpack.c.b16 %v1020, %v1018
        %v1045 = vpack.c.b16 %v1021, %v1019
        %v1046 = vpack.c.b16 %v1024, %v1022
        %v1047 = vpack.c.b16 %v1025, %v1023
        %v1048 = vpack.c.b16 %v1028, %v1026
        %v1049 = vpack.c.b16 %v1029, %v1027
        %v1050 = vpack.c.b16 %v1032, %v1030
        %v1051 = vpack.c.b16 %v1033, %v1031
        %v1052 = vpack.c.b16 %v1036, %v1034
        %v1053 = vpack.c.b16 %v1037, %v1035
        %1070 = vmatpush.bf16.msra.mxu0 %v1052
        %1071 = vmatpush.bf16.msra.mxu0 %v1050
        %1072 = vmatpush.bf16.msra.mxu0 %v1048
        %1073 = vmatpush.bf16.msra.mxu0 %v1046
        %1074 = vmatpush.bf16.msra.mxu0 %v1044
        %1075 = vmatpush.bf16.msra.mxu0 %v1042
        %1076 = vmatpush.bf16.msra.mxu0 %v1040
        %1077 = vmatpush.bf16.msra.mxu0 %v1038
        %1078 = vmatmul.bf16.gmra.mxu0 %v972
        %v1079 = vpop.f32.mrf.mxu0
        %v1080 = vadd.f32 0.0, %v1079
        %v1081 = vpop.f32.mrf.mxu0
        %v1082 = vadd.f32 0.0, %v1081
        %1083 = vdwg.mxu0
        %1084 = vmatpush.bf16.msra.mxu0 %v1053
        %1085 = vmatpush.bf16.msra.mxu0 %v1051
        %1086 = vmatpush.bf16.msra.mxu0 %v1049
        %1087 = vmatpush.bf16.msra.mxu0 %v1047
        %1088 = vmatpush.bf16.msra.mxu0 %v1045
        %1089 = vmatpush.bf16.msra.mxu0 %v1043
        %1090 = vmatpush.bf16.msra.mxu0 %v1041
        %1091 = vmatpush.bf16.msra.mxu0 %v1039
        %1092 = vmatmul.bf16.gmra.mxu0 %v972
        %v1093 = vpop.f32.mrf.mxu0
        %v1094 = vadd.f32 0.0, %v1093
        %v1095 = vpop.f32.mrf.mxu0
        %v1096 = vadd.f32 0.0, %v1095
        %1097 = vdwg.mxu0
        %v1114 = vunpack.c.l.b16 %v954
        %v1115 = vunpack.c.h.b16 %v954
        %v1116 = vunpack.c.l.b16 %v955
        %v1117 = vunpack.c.h.b16 %v955
        %v1118 = vunpack.c.l.b16 %v956
        %v1119 = vunpack.c.h.b16 %v956
        %v1120 = vunpack.c.l.b16 %v957
        %v1121 = vunpack.c.h.b16 %v957
        %v1122 = vunpack.c.l.b16 %v958
        %v1123 = vunpack.c.h.b16 %v958
        %v1124 = vunpack.c.l.b16 %v959
        %v1125 = vunpack.c.h.b16 %v959
        %v1126 = vunpack.c.l.b16 %v960
        %v1127 = vunpack.c.h.b16 %v960
        %v1128 = vunpack.c.l.b16 %v961
        %v1129 = vunpack.c.h.b16 %v961
        %v1130 = vunpack.c.l.b16 %v962
        %v1131 = vunpack.c.h.b16 %v962
        %v1132 = vunpack.c.l.b16 %v963
        %v1133 = vunpack.c.h.b16 %v963
        %v1134 = vunpack.c.l.b16 %v964
        %v1135 = vunpack.c.h.b16 %v964
        %v1136 = vunpack.c.l.b16 %v965
        %v1137 = vunpack.c.h.b16 %v965
        %v1138 = vunpack.c.l.b16 %v966
        %v1139 = vunpack.c.h.b16 %v966
        %v1140 = vunpack.c.l.b16 %v967
        %v1141 = vunpack.c.h.b16 %v967
        %v1142 = vunpack.c.l.b16 %v968
        %v1143 = vunpack.c.h.b16 %v968
        %v1144 = vunpack.c.l.b16 %v969
        %v1145 = vunpack.c.h.b16 %v969
        %v1146 = vpack.c.b16 %v1116, %v1114
        %v1147 = vpack.c.b16 %v1117, %v1115
        %v1148 = vpack.c.b16 %v1120, %v1118
        %v1149 = vpack.c.b16 %v1121, %v1119
        %v1150 = vpack.c.b16 %v1124, %v1122
        %v1151 = vpack.c.b16 %v1125, %v1123
        %v1152 = vpack.c.b16 %v1128, %v1126
        %v1153 = vpack.c.b16 %v1129, %v1127
        %v1154 = vpack.c.b16 %v1132, %v1130
        %v1155 = vpack.c.b16 %v1133, %v1131
        %v1156 = vpack.c.b16 %v1136, %v1134
        %v1157 = vpack.c.b16 %v1137, %v1135
        %v1158 = vpack.c.b16 %v1140, %v1138
        %v1159 = vpack.c.b16 %v1141, %v1139
        %v1160 = vpack.c.b16 %v1144, %v1142
        %v1161 = vpack.c.b16 %v1145, %v1143
        %1178 = vmatpush.bf16.msra.mxu0 %v1160
        %1179 = vmatpush.bf16.msra.mxu0 %v1158
        %1180 = vmatpush.bf16.msra.mxu0 %v1156
        %1181 = vmatpush.bf16.msra.mxu0 %v1154
        %1182 = vmatpush.bf16.msra.mxu0 %v1152
        %1183 = vmatpush.bf16.msra.mxu0 %v1150
        %1184 = vmatpush.bf16.msra.mxu0 %v1148
        %1185 = vmatpush.bf16.msra.mxu0 %v1146
        %1186 = vmatmul.bf16.gmra.mxu0 %v953
        %v1187 = vpop.f32.mrf.mxu0
        %v1188 = vadd.f32 %v1080, %v1187
        %v1189 = vpop.f32.mrf.mxu0
        %v1190 = vadd.f32 %v1082, %v1189
        %1191 = vdwg.mxu0
        %1192 = vmatpush.bf16.msra.mxu0 %v1161
        %1193 = vmatpush.bf16.msra.mxu0 %v1159
        %1194 = vmatpush.bf16.msra.mxu0 %v1157
        %1195 = vmatpush.bf16.msra.mxu0 %v1155
        %1196 = vmatpush.bf16.msra.mxu0 %v1153
        %1197 = vmatpush.bf16.msra.mxu0 %v1151
        %1198 = vmatpush.bf16.msra.mxu0 %v1149
        %1199 = vmatpush.bf16.msra.mxu0 %v1147
        %1200 = vmatmul.bf16.gmra.mxu0 %v953
        %v1201 = vpop.f32.mrf.mxu0
        %v1202 = vadd.f32 %v1094, %v1201
        %v1203 = vpop.f32.mrf.mxu0
        %v1204 = vadd.f32 %v1096, %v1203
        %1205 = vdwg.mxu0
        %v1206 = vld [vmem:[#allocation3 + $0x2] sm:$0xff]
        %v1207 = vld [vmem:[#allocation3 + $0xa] sm:$0xff]
        %v1208 = vpack.c.bf16 %v1207, %v1206
        %s1209 = scalar_lea.vmem [#allocation10], 256
        %v1210 = vld [vmem:[%s1209] sm:$0xff]
        %v1211 = vld [vmem:[%s1209 + $0x8] sm:$0xff]
        %v1212 = vld [vmem:[%s1209 + $0x10] sm:$0xff]
        %v1213 = vld [vmem:[%s1209 + $0x18] sm:$0xff]
        %v1214 = vld [vmem:[%s1209 + $0x20] sm:$0xff]
        %v1215 = vld [vmem:[%s1209 + $0x28] sm:$0xff]
        %v1216 = vld [vmem:[%s1209 + $0x30] sm:$0xff]
        %v1217 = vld [vmem:[%s1209 + $0x38] sm:$0xff]
        %v1218 = vld [vmem:[%s1209 + $0x40] sm:$0xff]
        %v1219 = vld [vmem:[%s1209 + $0x48] sm:$0xff]
        %v1220 = vld [vmem:[%s1209 + $0x50] sm:$0xff]
        %v1221 = vld [vmem:[%s1209 + $0x58] sm:$0xff]
        %v1222 = vld [vmem:[%s1209 + $0x60] sm:$0xff]
        %v1223 = vld [vmem:[%s1209 + $0x68] sm:$0xff]
        %v1224 = vld [vmem:[%s1209 + $0x70] sm:$0xff]
        %v1225 = vld [vmem:[%s1209 + $0x78] sm:$0xff]
        %v1242 = vunpack.c.l.b16 %v1210
        %v1243 = vunpack.c.h.b16 %v1210
        %v1244 = vunpack.c.l.b16 %v1211
        %v1245 = vunpack.c.h.b16 %v1211
        %v1246 = vunpack.c.l.b16 %v1212
        %v1247 = vunpack.c.h.b16 %v1212
        %v1248 = vunpack.c.l.b16 %v1213
        %v1249 = vunpack.c.h.b16 %v1213
        %v1250 = vunpack.c.l.b16 %v1214
        %v1251 = vunpack.c.h.b16 %v1214
        %v1252 = vunpack.c.l.b16 %v1215
        %v1253 = vunpack.c.h.b16 %v1215
        %v1254 = vunpack.c.l.b16 %v1216
        %v1255 = vunpack.c.h.b16 %v1216
        %v1256 = vunpack.c.l.b16 %v1217
        %v1257 = vunpack.c.h.b16 %v1217
        %v1258 = vunpack.c.l.b16 %v1218
        %v1259 = vunpack.c.h.b16 %v1218
        %v1260 = vunpack.c.l.b16 %v1219
        %v1261 = vunpack.c.h.b16 %v1219
        %v1262 = vunpack.c.l.b16 %v1220
        %v1263 = vunpack.c.h.b16 %v1220
        %v1264 = vunpack.c.l.b16 %v1221
        %v1265 = vunpack.c.h.b16 %v1221
        %v1266 = vunpack.c.l.b16 %v1222
        %v1267 = vunpack.c.h.b16 %v1222
        %v1268 = vunpack.c.l.b16 %v1223
        %v1269 = vunpack.c.h.b16 %v1223
        %v1270 = vunpack.c.l.b16 %v1224
        %v1271 = vunpack.c.h.b16 %v1224
        %v1272 = vunpack.c.l.b16 %v1225
        %v1273 = vunpack.c.h.b16 %v1225
        %v1274 = vpack.c.b16 %v1244, %v1242
        %v1275 = vpack.c.b16 %v1245, %v1243
        %v1276 = vpack.c.b16 %v1248, %v1246
        %v1277 = vpack.c.b16 %v1249, %v1247
        %v1278 = vpack.c.b16 %v1252, %v1250
        %v1279 = vpack.c.b16 %v1253, %v1251
        %v1280 = vpack.c.b16 %v1256, %v1254
        %v1281 = vpack.c.b16 %v1257, %v1255
        %v1282 = vpack.c.b16 %v1260, %v1258
        %v1283 = vpack.c.b16 %v1261, %v1259
        %v1284 = vpack.c.b16 %v1264, %v1262
        %v1285 = vpack.c.b16 %v1265, %v1263
        %v1286 = vpack.c.b16 %v1268, %v1266
        %v1287 = vpack.c.b16 %v1269, %v1267
        %v1288 = vpack.c.b16 %v1272, %v1270
        %v1289 = vpack.c.b16 %v1273, %v1271
        %1306 = vmatpush.bf16.msra.mxu0 %v1288
        %1307 = vmatpush.bf16.msra.mxu0 %v1286
        %1308 = vmatpush.bf16.msra.mxu0 %v1284
        %1309 = vmatpush.bf16.msra.mxu0 %v1282
        %1310 = vmatpush.bf16.msra.mxu0 %v1280
        %1311 = vmatpush.bf16.msra.mxu0 %v1278
        %1312 = vmatpush.bf16.msra.mxu0 %v1276
        %1313 = vmatpush.bf16.msra.mxu0 %v1274
        %1314 = vmatmul.bf16.gmra.mxu0 %v1208
        %v1315 = vpop.f32.mrf.mxu0
        %v1316 = vadd.f32 0.0, %v1315
        %v1317 = vpop.f32.mrf.mxu0
        %v1318 = vadd.f32 0.0, %v1317
        %1319 = vdwg.mxu0
        %1320 = vmatpush.bf16.msra.mxu0 %v1289
        %1321 = vmatpush.bf16.msra.mxu0 %v1287
        %1322 = vmatpush.bf16.msra.mxu0 %v1285
        %1323 = vmatpush.bf16.msra.mxu0 %v1283
        %1324 = vmatpush.bf16.msra.mxu0 %v1281
        %1325 = vmatpush.bf16.msra.mxu0 %v1279
        %1326 = vmatpush.bf16.msra.mxu0 %v1277
        %1327 = vmatpush.bf16.msra.mxu0 %v1275
        %1328 = vmatmul.bf16.gmra.mxu0 %v1208
        %v1329 = vpop.f32.mrf.mxu0
        %v1330 = vadd.f32 0.0, %v1329
        %v1331 = vpop.f32.mrf.mxu0
        %v1332 = vadd.f32 0.0, %v1331
        %1333 = vdwg.mxu0
        %v1334 = vadd.f32 %v1188, %v1316
        %v1335 = vadd.f32 %v1202, %v1330
        %v1336 = vadd.f32 %v1190, %v1318
        %v1337 = vadd.f32 %v1204, %v1332
        %v1338 = vld [vmem:[%s4] sm:$0x3]
        %v1340 = vperm.slane %v1338, 0
        %v1341 = vperm.slane %v1338, 1
        %v1344 = vadd.f32 %v1334, %v1340
        %v1345 = vadd.f32 %v1335, %v1341
        %v1346 = vadd.f32 %v1336, %v1340
        %v1347 = vadd.f32 %v1337, %v1341
        %v1348 = vmax.f32 %v1344, 0.0
        %v1349 = vmax.f32 %v1345, 0.0
        %v1350 = vmax.f32 %v1346, 0.0
        %v1351 = vmax.f32 %v1347, 0.0
        %v1356 = vrot.slane %v1349, 6
        %v1357 = vrot.slane %v1351, 6
        %v1358 = vsel %vm716, %v1348, %v1356
        %v1359 = vsel %vm718, %v1348, %v1356
        %v1360 = vrot.slane %v1359, 2
        %v1361 = vsel %vm721, %v1348, %v1356
        %v1362 = vrot.slane %v1361, 4
        %v1363 = vsel %vm724, %v1356, %v1348
        %v1364 = vrot.slane %v1363, 6
        %v1365 = vsel %vm716, %v1350, %v1357
        %v1366 = vsel %vm718, %v1350, %v1357
        %v1367 = vrot.slane %v1366, 2
        %v1368 = vsel %vm721, %v1350, %v1357
        %v1369 = vrot.slane %v1368, 4
        %v1370 = vsel %vm724, %v1357, %v1350
        %v1371 = vrot.slane %v1370, 6
        %v1380 = vrot.slane %v1358, 7
        %v1381 = vrot.slane %v1380, 2
        %v1382 = vrot.slane %v1360, 7
        %v1383 = vrot.slane %v1382, 2
        %v1384 = vrot.slane %v1362, 7
        %v1385 = vrot.slane %v1384, 2
        %v1386 = vrot.slane %v1364, 7
        %v1387 = vrot.slane %v1386, 2
        %v1388 = vrot.slane %v1365, 7
        %v1389 = vrot.slane %v1388, 2
        %v1390 = vrot.slane %v1367, 7
        %v1391 = vrot.slane %v1390, 2
        %v1392 = vrot.slane %v1369, 7
        %v1393 = vrot.slane %v1392, 2
        %v1394 = vrot.slane %v1371, 7
        %v1395 = vrot.slane %v1394, 2
        %v1404 = vmax.f32 %v1358, %v1381
        %v1405 = vmax.f32 %v1360, %v1383
        %v1406 = vmax.f32 %v1362, %v1385
        %v1407 = vmax.f32 %v1364, %v1387
        %v1408 = vmax.f32 %v1365, %v1389
        %v1409 = vmax.f32 %v1367, %v1391
        %v1410 = vmax.f32 %v1369, %v1393
        %v1411 = vmax.f32 %v1371, %v1395
        %v1420 = vrot.slane %v1404, 2
        %v1421 = vrot.slane %v1405, 2
        %v1422 = vrot.slane %v1406, 2
        %v1423 = vrot.slane %v1407, 2
        %v1424 = vrot.slane %v1408, 2
        %v1425 = vrot.slane %v1409, 2
        %v1426 = vrot.slane %v1410, 2
        %v1427 = vrot.slane %v1411, 2
        %v1436 = vmax.f32 %v1404, %v1420
        %v1437 = vmax.f32 %v1405, %v1421
        %v1438 = vmax.f32 %v1406, %v1422
        %v1439 = vmax.f32 %v1407, %v1423
        %v1440 = vmax.f32 %v1408, %v1424
        %v1441 = vmax.f32 %v1409, %v1425
        %v1442 = vmax.f32 %v1410, %v1426
        %v1443 = vmax.f32 %v1411, %v1427
        %v1452 = vperm.slane %v1436, 0
        %v1453 = vperm.slane %v1437, 0
        %v1454 = vperm.slane %v1438, 0
        %v1455 = vperm.slane %v1439, 0
        %v1456 = vperm.slane %v1440, 0
        %v1457 = vperm.slane %v1441, 0
        %v1458 = vperm.slane %v1442, 0
        %v1459 = vperm.slane %v1443, 0
        %v1460 = vsel %vm926, %v1453, %v1452
        %v1461 = vsel %vm928, %v1454, %v1460
        %v1462 = vsel %vm930, %v1455, %v1461
        %v1463 = vsel %vm932, %v1456, %v1462
        %v1464 = vsel %vm934, %v1457, %v1463
        %v1465 = vsel %vm936, %v1458, %v1464
        %v1466 = vsel %vm938, %v1459, %v1465
        %1468 = vst [vmem:[%s292] sm:$0xff] %v1466
        %s1469 = sand.u32 %s142, 1
        %s1470 = scalar_lea.sflag [#allocation6], %s1469
        %s1471 = sand.u32 %s142, 1
        %s1472 = smul.addr %s1471, 8
        %s1473 = scalar_lea.vmem [#allocation12], %s1472
        // Predicated region
        $region57: #{tpu_custom_call.1} parent=39 // pred_check
          %p1474 = pneg %p152
        $region58: #{tpu_custom_call.1} parent=39 // pred_check_branch
          %1476 = sbr.rel (%p1474) target = $region60
        $region59: #{tpu_custom_call.1} parent=39 // pred_region
          %1478 = vsyncadd %s1470, 0
          %s1479 = smul.addr %s24, 8
          %s1480 = scalar_lea.hbm %s5, %s1479
          %s1482 = sshll.u32 %s1473, 4
          %s1483 = int_to_ptr.vmem [resolvable:$true] %s1482
          %s1484 = sshll.u32 %s1480, 4
          %s1485 = int_to_ptr.hbm [resolvable:$true] %s1484
          %1487 = dma.vmem_to_hbm [thread:$0]  %s1483, 128, %s1485, %s1470
        $region60: #{tpu_custom_call.1} parent=39 // pred_fallthru
          _
      $region40: #{tpu_custom_call.1} parent=5 // pred_fallthru
        _
      %p1488 = scmp.le.s32.totalorder 2, %s19
      // Predicated region
      $region61: #{tpu_custom_call.1} parent=5 // pred_check
        %p1489 = pneg %p1488
      $region62: #{tpu_custom_call.1} parent=5 // pred_check_branch
        %1491 = sbr.rel (%p1489) target = $region64
      $region63: #{tpu_custom_call.1} parent=5 // pred_region
        %s1492 = ssub.s32 %s19, 2
        // Predicated region
        $region65: #{tpu_custom_call.1} parent=63 // pred_check
          %p1493 = pneg %p158
        $region66: #{tpu_custom_call.1} parent=63 // pred_check_branch
          %1495 = sbr.rel (%p1493) target = $region68
        $region67: #{tpu_custom_call.1} parent=63 // pred_region
          %s1496 = sand.u32 %s143, 1
          %s1497 = scalar_lea.sflag [#allocation6], %s1496
          %s1498 = sand.u32 %s143, 1
          %s1499 = smul.addr %s1498, 8
          %s1500 = scalar_lea.vmem [#allocation12], %s1499
          %1502 = dma.done %s1497, 128
        $region68: #{tpu_custom_call.1} parent=63 // pred_fallthru
          _
      $region64: #{tpu_custom_call.1} parent=5 // pred_fallthru
        _
    $region6: #{tpu_custom_call.1} parent=1 // loop_footer
      %s23 = sadd.s32 1, %s19
    $region7: #{tpu_custom_call.1} parent=1 // loop_footer_branch
      %18 = sbr.rel target = $region3
    $region8: #{tpu_custom_call.1} parent=1 // loop_exit
      _
    %1503 = vsyncpa [#allocation5], 1
    %s1504 = scalar_lea.sflag [#allocation5], 1
    %1505 = vsyncpa %s1504, 1
    %1506 = vsyncpa [#allocation8], 1
    %1507 = vsyncpa [#allocation11], 1
    %1508 = vsyncpa [#allocation6], 1
    %s1509 = scalar_lea.sflag [#allocation6], 1
    %1510 = vsyncpa %s1509, 1

</llo_original>
